<compile_context>
chip_gen: v6e
topology: v6e:2x2x1
jax: 0.10.0
libtpu: 0.0.40
codegen_flags: <defaults>
</compile_context>

<pallas_src>
import functools

import jax
import jax.numpy as jnp
from jax.experimental import pallas as pl
from jax.experimental.pallas import tpu as pltpu


def _deq_kernel(x_ref, w_ref, b_ref, out_ref, z_ref, s_ref, *, iters):
    # x_ref:   (1, H, W, Cp)   f32  input injection (channel-padded, NHWC)
    # w_ref:   (3, Cp, 3*Cp)   bf16 fused conv weight; per kernel-row dh the RHS maps
    #                          Cp input channels -> [dw=0 | dw=1 | dw=2] blocks of Cp outputs
    # b_ref:   (1, Cp)         f32  conv bias (zero on padded channels)
    # out_ref: (1, H, W, Cp)   f32  final state (lane-dense, full-width stores)
    # z_ref:   (H+2, W, Cp)    bf16 H-padded state scratch (rows 0 and H+1 stay zero)
    # s_ref:   (H, W+8, Cp)    f32  zero-bordered staging buffer for the W-direction shifts
    _, H, W, Cp = x_ref.shape

    # z_0 = 0; also zeroes the H-padding rows and the staging borders (kept zero forever).
    z_ref[...] = jnp.zeros_like(z_ref)
    s_ref[...] = jnp.zeros_like(s_ref)
    out_ref[...] = jnp.zeros_like(out_ref)   # well-defined result even for iters == 0

    # Hoisted loop invariant: input injection + bias (seeds the center-tap accumulator).
    xb = x_ref[0, :, :, :] + b_ref[...].reshape(1, 1, Cp)          # (H, W, Cp) f32

    def body(it, carry):
        # 3x3 conv = 3 lane-dense MXU matmuls (one per kernel row dh).
        acc_l = jnp.zeros((H, W, Cp), jnp.float32)   # dw = 0 taps -> need shift right
        acc_c = xb                                   # dw = 1 taps -> in place
        acc_r = jnp.zeros((H, W, Cp), jnp.float32)   # dw = 2 taps -> need shift left
        for dh in range(3):                          # static unroll: 3 matmuls / iteration
            # dh offset = free leading-dim slice of the H-padded bf16 state.
            lhs = z_ref[dh:dh + H, :, :].reshape(H * W, Cp)        # bf16 (H*W, Cp)
            y = jnp.dot(lhs, w_ref[dh, :, :],
                        preferred_element_type=jnp.float32)        # (H*W, 3*Cp) f32
            y = y.reshape(H, W, 3 * Cp)
            acc_l = acc_l + y[:, :, 0 * Cp:1 * Cp]
            acc_c = acc_c + y[:, :, 1 * Cp:2 * Cp]
            acc_r = acc_r + y[:, :, 2 * Cp:3 * Cp]

        # SAME zero-padding in W: shift dw=0 / dw=2 contributions by +1 / -1 column
        # through the zero-bordered staging buffer (2 shifted slabs per iteration,
        # replacing the previous 9 unaligned slice+reshape copies of the padded state).
        s_ref[:, 1:1 + W, :] = acc_l
        pre = acc_c + s_ref[:, 0:W, :]               # pre[w] += acc_l[w-1], 0 at w=0
        s_ref[:, 1:1 + W, :] = acc_r
        pre = pre + s_ref[:, 2:2 + W, :]             # pre[w] += acc_r[w+1], 0 at w=W-1

        z_new = jnp.maximum(pre, 0.0)                              # f32 VPU math
        z_ref[1:1 + H, :, :] = z_new.astype(z_ref.dtype)           # bf16 state for next MXU pass
        out_ref[0, :, :, :] = z_new                                # keep the f32 result
        return carry

    jax.lax.fori_loop(0, iters, body, 0)


def deq_layer_pallas(x_nchw, weight_oihw, bias, num_layers):
    """Pallas implementation of DEQLayer2.forward (weight-tied unrolled path).

    Args:
      x_nchw:      (B, C, H, W) float32 input injection (PyTorch NCHW).
      weight_oihw: (C, C, 3, 3) float32 conv weight (PyTorch OIHW).
      bias:        (C,)         float32 conv bias.
      num_layers:  number of recurrence steps (the module's num_layers).
    Returns:
      (new_z1 [B,C,H,W], jac_loss [1,1], sradius [B,1]) matching the module's signature.
    """
    B, C, H, W = x_nchw.shape
    Cp = max(128, ((C + 127) // 128) * 128)          # lane-dense channel padding

    # NCHW -> NHWC, pad channels to Cp (padded channels carry exact zeros throughout).
    x_nhwc = jnp.transpose(x_nchw, (0, 2, 3, 1)).astype(jnp.float32)
    x_nhwc = jnp.pad(x_nhwc, ((0, 0), (0, 0), (0, 0), (0, Cp - C)))

    # OIHW -> fused per-kernel-row RHS: w_fused[dh, ci, dw*Cp + co] = weight[co, ci, dh, dw].
    w = jnp.transpose(weight_oihw, (2, 3, 1, 0)).astype(jnp.float32)   # (kh, kw, Cin, Cout)
    w = jnp.pad(w, ((0, 0), (0, 0), (0, Cp - C), (0, Cp - C)))          # (3, 3, Cp, Cp)
    w_fused = jnp.transpose(w, (0, 2, 1, 3)).reshape(3, Cp, 3 * Cp).astype(jnp.bfloat16)

    b_pad = jnp.pad(bias.astype(jnp.float32), (0, Cp - C)).reshape(1, Cp)

    out_nhwc = pl.pallas_call(
        functools.partial(_deq_kernel, iters=num_layers),
        out_shape=jax.ShapeDtypeStruct((B, H, W, Cp), jnp.float32),
        grid=(B,),
        in_specs=[
            pl.BlockSpec((1, H, W, Cp), lambda b: (b, 0, 0, 0)),
            pl.BlockSpec((3, Cp, 3 * Cp), lambda b: (0, 0, 0)),
            pl.BlockSpec((1, Cp), lambda b: (0, 0)),
        ],
        out_specs=pl.BlockSpec((1, H, W, Cp), lambda b: (b, 0, 0, 0)),
        scratch_shapes=[
            pltpu.VMEM((H + 2, W, Cp), jnp.bfloat16),   # H-padded state (bf16 MXU operand)
            pltpu.VMEM((H, W + 8, Cp), jnp.float32),    # zero-bordered W-shift staging buffer
        ],
        compiler_params=pltpu.CompilerParams(
            dimension_semantics=("parallel",),          # batch across TCs on v7x megacore
        ),
    )(x_nhwc, w_fused, b_pad)

    out_nchw = jnp.transpose(out_nhwc[..., :C], (0, 3, 1, 2))
    # TODO(synk): the adaptive fixed-point solver (anderson/broyden with data-dependent
    # stopping), the implicit-gradient backward hook, jac_loss_estimate and the
    # power-method spectral radius have no clean Pallas equivalent; this implements the
    # fixed-iteration weight-tied forward and returns zero jac_loss / sradius.
    jac_loss = jnp.zeros((1, 1), jnp.float32)
    sradius = jnp.zeros((B, 1), jnp.float32)
    return out_nchw, jac_loss, sradius


def _reference_forward(x_nchw, weight_oihw, bias, iters):
    """Pure-JAX reference of the same recurrence (for validation)."""
    x_nhwc = jnp.transpose(x_nchw, (0, 2, 3, 1)).astype(jnp.float32)
    w_hwio = jnp.transpose(weight_oihw, (2, 3, 1, 0)).astype(jnp.float32)
    z = jnp.zeros_like(x_nhwc)
    for _ in range(iters):
        y = jax.lax.conv_general_dilated(
            z, w_hwio, window_strides=(1, 1), padding="SAME",
            dimension_numbers=("NHWC", "HWIO", "NHWC"))
        z = jnp.maximum(y + bias.reshape(1, 1, 1, -1) + x_nhwc, 0.0)
    return jnp.transpose(z, (0, 3, 1, 2))


if __name__ == "__main__":
    B, C, H, W = 2, 32, 16, 16
    ITERS = 5

    key = jax.random.PRNGKey(0)
    k_x, k_w, k_b = jax.random.split(key, 3)

    x = jax.random.normal(k_x, (B, C, H, W), dtype=jnp.float32)
    # Small-scale init so the weight-tied recurrence stays well-behaved.
    weight = jax.random.normal(k_w, (C, C, 3, 3), dtype=jnp.float32) * (0.1 / (C * 9) ** 0.5)
    bias = jax.random.normal(k_b, (C,), dtype=jnp.float32) * 0.01

    out, jac_loss, sradius = deq_layer_pallas(x, weight, bias, ITERS)
    out = jax.block_until_ready(out)

    ref = jax.block_until_ready(_reference_forward(x, weight, bias, ITERS))
    assert out.shape == (B, C, H, W)
    assert jac_loss.shape == (1, 1) and sradius.shape == (B, 1)
    # bf16 MXU operands / bf16 state with f32 accumulation -> slightly looser tolerance.
    assert jnp.allclose(out, ref, atol=5e-3, rtol=1e-2), "mismatch vs reference"

    print("KERNEL_OK")
</pallas_src>

<mosaic_0001>
module attributes {stable_mosaic.version = 11 : i64} {
  func.func @_deq_kernel(%arg0: i32, %arg1: memref<1x16x16x128xf32, #tpu.memory_space<vmem>>, %arg2: memref<3x128x384xbf16, #tpu.memory_space<vmem>>, %arg3: memref<1x128xf32, #tpu.memory_space<vmem>>, %arg4: memref<1x16x16x128xf32, #tpu.memory_space<vmem>>, %arg5: memref<18x16x128xbf16, #tpu.memory_space<vmem>>, %arg6: memref<16x24x128xf32, #tpu.memory_space<vmem>>) attributes {dimension_semantics = [#tpu.dimension_semantics<parallel>], iteration_bounds = array<i64: 2>, scalar_prefetch = 0 : i64, scratch_operands = 2 : i64, tpu.core_type = #tpu.core_type<tc>, window_params = [{transform_indices = @transform_0, window_bounds = array<i64: 1, 16, 16, 128>}, {pipeline_mode = #tpu.pipeline_mode<synchronous>, transform_indices = @transform_1, window_bounds = array<i64: 3, 128, 384>}, {pipeline_mode = #tpu.pipeline_mode<synchronous>, transform_indices = @transform_2, window_bounds = array<i64: 1, 128>}, {transform_indices = @transform_3, window_bounds = array<i64: 1, 16, 16, 128>}]} {
    %cst = arith.constant 0.000000e+00 : bf16
    %0 = vector.broadcast %cst : bf16 to vector<18x16x128xbf16>
    %c0 = arith.constant 0 : index
    %c0_0 = arith.constant 0 : index
    %c0_1 = arith.constant 0 : index
    %1 = vector.load %arg5[%c0, %c0_0, %c0_1] : memref<18x16x128xbf16, #tpu.memory_space<vmem>>, vector<18x16x128xbf16>
    tpu.vector_store %arg5[%c0, %c0_0, %c0_1], %0 {strides = array<i32>} : memref<18x16x128xbf16, #tpu.memory_space<vmem>>, vector<18x16x128xbf16>,
    %cst_2 = arith.constant 0.000000e+00 : f32
    %2 = vector.broadcast %cst_2 : f32 to vector<16x24x128xf32>
    %c0_3 = arith.constant 0 : index
    %c0_4 = arith.constant 0 : index
    %c0_5 = arith.constant 0 : index
    %3 = vector.load %arg6[%c0_3, %c0_4, %c0_5] : memref<16x24x128xf32, #tpu.memory_space<vmem>>, vector<16x24x128xf32>
    tpu.vector_store %arg6[%c0_3, %c0_4, %c0_5], %2 {strides = array<i32>} : memref<16x24x128xf32, #tpu.memory_space<vmem>>, vector<16x24x128xf32>,
    %cst_6 = arith.constant 0.000000e+00 : f32
    %4 = vector.broadcast %cst_6 : f32 to vector<1x16x16x128xf32>
    %c0_7 = arith.constant 0 : index
    %c0_8 = arith.constant 0 : index
    %c0_9 = arith.constant 0 : index
    %c0_10 = arith.constant 0 : index
    %5 = vector.load %arg4[%c0_7, %c0_8, %c0_9, %c0_10] : memref<1x16x16x128xf32, #tpu.memory_space<vmem>>, vector<1x16x16x128xf32>
    tpu.vector_store %arg4[%c0_7, %c0_8, %c0_9, %c0_10], %4 {strides = array<i32>} : memref<1x16x16x128xf32, #tpu.memory_space<vmem>>, vector<1x16x16x128xf32>,
    %c0_11 = arith.constant 0 : index
    %c0_12 = arith.constant 0 : index
    %c0_13 = arith.constant 0 : index
    %c0_14 = arith.constant 0 : index
    %6 = vector.load %arg1[%c0_11, %c0_12, %c0_13, %c0_14] : memref<1x16x16x128xf32, #tpu.memory_space<vmem>>, vector<1x16x16x128xf32>
    %7 = vector.shape_cast %6 : vector<1x16x16x128xf32> to vector<16x16x128xf32>
    %c0_15 = arith.constant 0 : index
    %c0_16 = arith.constant 0 : index
    %8 = vector.load %arg3[%c0_15, %c0_16] : memref<1x128xf32, #tpu.memory_space<vmem>>, vector<1x128xf32>
    %9 = vector.shape_cast %8 : vector<1x128xf32> to vector<1x1x128xf32>
    %10 = vector.broadcast %9 : vector<1x1x128xf32> to vector<16x16x128xf32>
    %11 = arith.addf %7, %10 : vector<16x16x128xf32>
    %c0_i32 = arith.constant 0 : i32
    %c5_i32 = arith.constant 5 : i32
    %12 = arith.addi %c0_i32, %c5_i32 : i32
    %c1_i32 = arith.constant 1 : i32
    scf.for %arg7 = %c0_i32 to %12 step %c1_i32  : i32 {
      %cst_17 = arith.constant 0.000000e+00 : f32
      %13 = vector.broadcast %cst_17 : f32 to vector<16x16x128xf32>
      %cst_18 = arith.constant 0.000000e+00 : f32
      %14 = vector.broadcast %cst_18 : f32 to vector<16x16x128xf32>
      %c0_19 = arith.constant 0 : index
      %c0_20 = arith.constant 0 : index
      %c0_21 = arith.constant 0 : index
      %15 = vector.load %arg5[%c0_19, %c0_20, %c0_21] : memref<18x16x128xbf16, #tpu.memory_space<vmem>>, vector<16x16x128xbf16>
      %16 = vector.shape_cast %15 : vector<16x16x128xbf16> to vector<256x128xbf16>
      %c0_22 = arith.constant 0 : index
      %c0_23 = arith.constant 0 : index
      %c0_24 = arith.constant 0 : index
      %17 = vector.load %arg2[%c0_22, %c0_23, %c0_24] : memref<3x128x384xbf16, #tpu.memory_space<vmem>>, vector<1x128x384xbf16>
      %18 = vector.shape_cast %17 : vector<1x128x384xbf16> to vector<128x384xbf16>
      %cst_25 = arith.constant dense<0.000000e+00> : vector<256x384xf32>
      %19 = tpu.matmul %16, %18, %cst_25 {dimension_numbers = #tpu.dot_dimension_numbers<[1], [0], [0], [1], [0, 0, 1, 1], [], []>} : vector<256x128xbf16>, vector<128x384xbf16>, vector<256x384xf32> -> vector<256x384xf32>
      %20 = vector.shape_cast %19 : vector<256x384xf32> to vector<16x16x384xf32>
      %21 = vector.extract_strided_slice %20 {offsets = [0, 0, 0], sizes = [16, 16, 128], strides = [1, 1, 1]} : vector<16x16x384xf32> to vector<16x16x128xf32>
      %22 = arith.addf %13, %21 : vector<16x16x128xf32>
      %23 = vector.extract_strided_slice %20 {offsets = [0, 0, 128], sizes = [16, 16, 128], strides = [1, 1, 1]} : vector<16x16x384xf32> to vector<16x16x128xf32>
      %24 = arith.addf %11, %23 : vector<16x16x128xf32>
      %25 = vector.extract_strided_slice %20 {offsets = [0, 0, 256], sizes = [16, 16, 128], strides = [1, 1, 1]} : vector<16x16x384xf32> to vector<16x16x128xf32>
      %26 = arith.addf %14, %25 : vector<16x16x128xf32>
      %c1 = arith.constant 1 : index
      %c0_26 = arith.constant 0 : index
      %c0_27 = arith.constant 0 : index
      %27 = vector.load %arg5[%c1, %c0_26, %c0_27] : memref<18x16x128xbf16, #tpu.memory_space<vmem>>, vector<16x16x128xbf16>
      %28 = vector.shape_cast %27 : vector<16x16x128xbf16> to vector<256x128xbf16>
      %c1_28 = arith.constant 1 : index
      %c0_29 = arith.constant 0 : index
      %c0_30 = arith.constant 0 : index
      %29 = vector.load %arg2[%c1_28, %c0_29, %c0_30] : memref<3x128x384xbf16, #tpu.memory_space<vmem>>, vector<1x128x384xbf16>
      %30 = vector.shape_cast %29 : vector<1x128x384xbf16> to vector<128x384xbf16>
      %cst_31 = arith.constant dense<0.000000e+00> : vector<256x384xf32>
      %31 = tpu.matmul %28, %30, %cst_31 {dimension_numbers = #tpu.dot_dimension_numbers<[1], [0], [0], [1], [0, 0, 1, 1], [], []>} : vector<256x128xbf16>, vector<128x384xbf16>, vector<256x384xf32> -> vector<256x384xf32>
      %32 = vector.shape_cast %31 : vector<256x384xf32> to vector<16x16x384xf32>
      %33 = vector.extract_strided_slice %32 {offsets = [0, 0, 0], sizes = [16, 16, 128], strides = [1, 1, 1]} : vector<16x16x384xf32> to vector<16x16x128xf32>
      %34 = arith.addf %22, %33 : vector<16x16x128xf32>
      %35 = vector.extract_strided_slice %32 {offsets = [0, 0, 128], sizes = [16, 16, 128], strides = [1, 1, 1]} : vector<16x16x384xf32> to vector<16x16x128xf32>
      %36 = arith.addf %24, %35 : vector<16x16x128xf32>
      %37 = vector.extract_strided_slice %32 {offsets = [0, 0, 256], sizes = [16, 16, 128], strides = [1, 1, 1]} : vector<16x16x384xf32> to vector<16x16x128xf32>
      %38 = arith.addf %26, %37 : vector<16x16x128xf32>
      %c2 = arith.constant 2 : index
      %c0_32 = arith.constant 0 : index
      %c0_33 = arith.constant 0 : index
      %39 = vector.load %arg5[%c2, %c0_32, %c0_33] : memref<18x16x128xbf16, #tpu.memory_space<vmem>>, vector<16x16x128xbf16>
      %40 = vector.shape_cast %39 : vector<16x16x128xbf16> to vector<256x128xbf16>
      %c2_34 = arith.constant 2 : index
      %c0_35 = arith.constant 0 : index
      %c0_36 = arith.constant 0 : index
      %41 = vector.load %arg2[%c2_34, %c0_35, %c0_36] : memref<3x128x384xbf16, #tpu.memory_space<vmem>>, vector<1x128x384xbf16>
      %42 = vector.shape_cast %41 : vector<1x128x384xbf16> to vector<128x384xbf16>
      %cst_37 = arith.constant dense<0.000000e+00> : vector<256x384xf32>
      %43 = tpu.matmul %40, %42, %cst_37 {dimension_numbers = #tpu.dot_dimension_numbers<[1], [0], [0], [1], [0, 0, 1, 1], [], []>} : vector<256x128xbf16>, vector<128x384xbf16>, vector<256x384xf32> -> vector<256x384xf32>
      %44 = vector.shape_cast %43 : vector<256x384xf32> to vector<16x16x384xf32>
      %45 = vector.extract_strided_slice %44 {offsets = [0, 0, 0], sizes = [16, 16, 128], strides = [1, 1, 1]} : vector<16x16x384xf32> to vector<16x16x128xf32>
      %46 = arith.addf %34, %45 : vector<16x16x128xf32>
      %47 = vector.extract_strided_slice %44 {offsets = [0, 0, 128], sizes = [16, 16, 128], strides = [1, 1, 1]} : vector<16x16x384xf32> to vector<16x16x128xf32>
      %48 = arith.addf %36, %47 : vector<16x16x128xf32>
      %49 = vector.extract_strided_slice %44 {offsets = [0, 0, 256], sizes = [16, 16, 128], strides = [1, 1, 1]} : vector<16x16x384xf32> to vector<16x16x128xf32>
      %50 = arith.addf %38, %49 : vector<16x16x128xf32>
      %c0_38 = arith.constant 0 : index
      %c1_39 = arith.constant 1 : index
      %c0_40 = arith.constant 0 : index
      %51 = vector.load %arg6[%c0_38, %c1_39, %c0_40] : memref<16x24x128xf32, #tpu.memory_space<vmem>>, vector<16x16x128xf32>
      tpu.vector_store %arg6[%c0_38, %c1_39, %c0_40], %46 {strides = array<i32>} : memref<16x24x128xf32, #tpu.memory_space<vmem>>, vector<16x16x128xf32>,
      %c0_41 = arith.constant 0 : index
      %c0_42 = arith.constant 0 : index
      %c0_43 = arith.constant 0 : index
      %52 = vector.load %arg6[%c0_41, %c0_42, %c0_43] : memref<16x24x128xf32, #tpu.memory_space<vmem>>, vector<16x16x128xf32>
      %53 = arith.addf %48, %52 : vector<16x16x128xf32>
      %c0_44 = arith.constant 0 : index
      %c1_45 = arith.constant 1 : index
      %c0_46 = arith.constant 0 : index
      %54 = vector.load %arg6[%c0_44, %c1_45, %c0_46] : memref<16x24x128xf32, #tpu.memory_space<vmem>>, vector<16x16x128xf32>
      tpu.vector_store %arg6[%c0_44, %c1_45, %c0_46], %50 {strides = array<i32>} : memref<16x24x128xf32, #tpu.memory_space<vmem>>, vector<16x16x128xf32>,
      %c0_47 = arith.constant 0 : index
      %c2_48 = arith.constant 2 : index
      %c0_49 = arith.constant 0 : index
      %55 = vector.load %arg6[%c0_47, %c2_48, %c0_49] : memref<16x24x128xf32, #tpu.memory_space<vmem>>, vector<16x16x128xf32>
      %56 = arith.addf %53, %55 : vector<16x16x128xf32>
      %cst_50 = arith.constant 0.000000e+00 : f32
      %57 = vector.broadcast %cst_50 : f32 to vector<16x16x128xf32>
      %58 = arith.maximumf %56, %57 : vector<16x16x128xf32>
      %59 = arith.truncf %58 : vector<16x16x128xf32> to vector<16x16x128xbf16>
      %c1_51 = arith.constant 1 : index
      %c0_52 = arith.constant 0 : index
      %c0_53 = arith.constant 0 : index
      %60 = vector.load %arg5[%c1_51, %c0_52, %c0_53] : memref<18x16x128xbf16, #tpu.memory_space<vmem>>, vector<16x16x128xbf16>
      tpu.vector_store %arg5[%c1_51, %c0_52, %c0_53], %59 {strides = array<i32>} : memref<18x16x128xbf16, #tpu.memory_space<vmem>>, vector<16x16x128xbf16>,
      %c0_54 = arith.constant 0 : index
      %c0_55 = arith.constant 0 : index
      %c0_56 = arith.constant 0 : index
      %c0_57 = arith.constant 0 : index
      %61 = vector.load %arg4[%c0_54, %c0_55, %c0_56, %c0_57] : memref<1x16x16x128xf32, #tpu.memory_space<vmem>>, vector<1x16x16x128xf32>
      %62 = vector.shape_cast %61 : vector<1x16x16x128xf32> to vector<16x16x128xf32>
      %63 = vector.shape_cast %58 : vector<16x16x128xf32> to vector<1x16x16x128xf32>
      tpu.vector_store %arg4[%c0_54, %c0_55, %c0_56, %c0_57], %63 {strides = array<i32>} : memref<1x16x16x128xf32, #tpu.memory_space<vmem>>, vector<1x16x16x128xf32>,
    }
    return
  }
  func.func @transform_0(%arg0: i32) -> (i32, i32, i32, i32) {
    %c0_i32 = arith.constant 0 : i32
    %c0_i32_0 = arith.constant 0 : i32
    %c0_i32_1 = arith.constant 0 : i32
    %c0_i32_2 = arith.constant 0 : i32
    return %arg0, %c0_i32, %c0_i32_0, %c0_i32_1 : i32, i32, i32, i32
  }
  func.func @transform_1(%arg0: i32) -> (i32, i32, i32) {
    %c0_i32 = arith.constant 0 : i32
    %c0_i32_0 = arith.constant 0 : i32
    %c0_i32_1 = arith.constant 0 : i32
    %c0_i32_2 = arith.constant 0 : i32
    return %c0_i32, %c0_i32_0, %c0_i32_1 : i32, i32, i32
  }
  func.func @transform_2(%arg0: i32) -> (i32, i32) {
    %c0_i32 = arith.constant 0 : i32
    %c0_i32_0 = arith.constant 0 : i32
    %c0_i32_1 = arith.constant 0 : i32
    return %c0_i32, %c0_i32_0 : i32, i32
  }
  func.func @transform_3(%arg0: i32) -> (i32, i32, i32, i32) {
    %c0_i32 = arith.constant 0 : i32
    %c0_i32_0 = arith.constant 0 : i32
    %c0_i32_1 = arith.constant 0 : i32
    %c0_i32_2 = arith.constant 0 : i32
    return %arg0, %c0_i32, %c0_i32_0, %c0_i32_1 : i32, i32, i32, i32
  }
}

</mosaic_0001>

<llo_original>
// kernel: tpu_custom_call.1
$region0: #{tpu_custom_call.1}
  #allocation0 [shape = 'u32[]', space=smem, size = 0x4, offset = 0x4, fixed_abs, tag = 'smem constant byte address 0x4 - core index']
  #allocation1 [shape = 'u32[144,128]{1,0:T(1,128)}', space=vmem, size = 0x12000, scoped, tag = 'internal scratch']
  #allocation2 [shape = 'bf16[18,16,128]{2,1,0:T(8,128)(2,1)}', space=vmem, size = 0x12000, scoped, tag = 'scratch operand']
  #allocation3 [shape = 'f32[16,24,128]{2,1,0:T(8,128)}', space=vmem, size = 0x30000, scoped, tag = 'scratch operand']
  %s0 = inlined_call_operand.hbm [shape: f32[2,16,16,128], index: 0, kind: input, shape index: {}]
  %s1 = inlined_call_operand.hbm [shape: bf16[3,128,384], index: 1, kind: input, shape index: {}]
  %s2 = inlined_call_operand.vmem [shape: f32[1,128], index: 2, kind: input, shape index: {}]
  %s3 = inlined_call_operand.hbm [shape: f32[2,16,16,128], index: 3, kind: output, shape index: {}]
  %s4 = sld [smem:[#allocation0]]
  $region60: #{tpu_custom_call.1} parent=0
    _
  %s6 = ssub.s32 1, %s4
  %s7 = scalar_select 0, %s6, %s4
  $region1: #{tpu_custom_call.1} parent=0
    #allocation4 [shape = 'u8[262144]{0}', space=vmem, size = 0x40000, scoped, tag = 'input window, operand 0']
    #allocation5 [shape = 's32[2]{0}', space=sflag, size = 0x8, scoped, tag = 'scoped memory for tpu_custom_call.1']
    #allocation6 [shape = 's32[2]{0}', space=sflag, size = 0x8, scoped, tag = 'scoped memory for tpu_custom_call.1']
    #allocation7 [shape = 'u8[294912]{0}', space=vmem, size = 0x48000, scoped, tag = 'input window, operand 1, single buffered']
    #allocation8 [shape = 's32[1]{0}', space=sflag, size = 0x4, scoped, tag = 'scoped memory for tpu_custom_call.1']
    #allocation9 [shape = 'u8[262144]{0}', space=vmem, size = 0x40000, scoped, tag = 'output window, operand 0']
    %8 = vsyncpa [#allocation5], 0
    %s9 = scalar_lea.sflag [#allocation5], 1
    %10 = vsyncpa %s9, 0
    %11 = vsyncpa [#allocation8], 0
    %12 = vsyncpa [#allocation6], 0
    %s13 = scalar_lea.sflag [#allocation6], 1
    %14 = vsyncpa %s13, 0
    loop: start=0, step=1, limit=4
    $region2: #{tpu_custom_call.1} parent=1 // loop_pre_header
      _
    $region3: #{tpu_custom_call.1} parent=1 // loop_header
      %s16 = sphi 0, %s20
      %p17 = scmp.ge.s32.totalorder %s16, 4
      %s26 = sphi 0, %s28
      %s29 = sphi 0, %s26
      %s30 = sphi 0, %s29
      %s46 = sphi 0, %s30
      %s50 = sphi 0, %s50
      %s52 = sphi 0, %s50
      %s53 = sphi 0, %s52
      %s67 = sphi 0, %s53
      %s71 = sphi 0, %s71
      %s73 = sphi 0, %s71
      %s74 = sphi 0, %s73
      %s88 = sphi 0, %s74
      %s94 = sphi 0, %s96
      %s97 = sphi 0, %s94
      %s98 = sphi 0, %s97
      %s114 = sphi 0, %s98
    $region4: #{tpu_custom_call.1} parent=1 // loop_header_branch
      %19 = sbr.rel (%p17) target = $region8
    $region5: #{tpu_custom_call.1} parent=1 // loop_body
      %s21 = ssub.s32 %s16, 1
      %s22 = ssub.s32 %s16, 2
      %s23 = sadd.s32 %s16, 1
      %s24 = ssub.s32 %s16, %s23
      %p25 = scmp.eq.s32.totalorder %s24, 0
      %s27 = sadd.s32 %s26, 1
      %s28 = scalar_select %p25, %s26, %s27
      %p31 = pneg %p25
      %p32 = scmp.eq.s32.totalorder %s16, 1
      %p33 = por %p31, %p32
      %p34 = scmp.ne.s32.totalorder %s26, %s29
      %p35 = scmp.eq.s32.totalorder %s16, 0
      %p36 = por %p34, %p35
      %p37 = scmp.ne.s32.totalorder %s26, %s29
      %p38 = scmp.eq.s32.totalorder %s21, 1
      %p39 = por %p37, %p38
      %p40 = scmp.ne.s32.totalorder %s29, %s30
      %p41 = scmp.eq.s32.totalorder %s21, 0
      %p42 = por %p40, %p41
      %p43 = scmp.ne.s32.totalorder %s29, %s30
      %p44 = scmp.eq.s32.totalorder %s22, 1
      %p45 = por %p43, %p44
      %p47 = scmp.ne.s32.totalorder %s30, %s46
      %p48 = scmp.eq.s32.totalorder %s22, 0
      %p49 = por %p47, %p48
      %s51 = sadd.s32 %s50, 1
      %p54 = scmp.eq.s32.totalorder %s16, 1
      %p55 = scmp.ne.s32.totalorder %s50, %s52
      %p56 = scmp.eq.s32.totalorder %s16, 0
      %p57 = por %p55, %p56
      %p58 = scmp.ne.s32.totalorder %s50, %s52
      %p59 = scmp.eq.s32.totalorder %s21, 1
      %p60 = por %p58, %p59
      %p61 = scmp.ne.s32.totalorder %s52, %s53
      %p62 = scmp.eq.s32.totalorder %s21, 0
      %p63 = por %p61, %p62
      %p64 = scmp.ne.s32.totalorder %s52, %s53
      %p65 = scmp.eq.s32.totalorder %s22, 1
      %p66 = por %p64, %p65
      %p68 = scmp.ne.s32.totalorder %s53, %s67
      %p69 = scmp.eq.s32.totalorder %s22, 0
      %p70 = por %p68, %p69
      %s72 = sadd.s32 %s71, 1
      %p75 = scmp.eq.s32.totalorder %s16, 1
      %p76 = scmp.ne.s32.totalorder %s71, %s73
      %p77 = scmp.eq.s32.totalorder %s16, 0
      %p78 = por %p76, %p77
      %p79 = scmp.ne.s32.totalorder %s71, %s73
      %p80 = scmp.eq.s32.totalorder %s21, 1
      %p81 = por %p79, %p80
      %p82 = scmp.ne.s32.totalorder %s73, %s74
      %p83 = scmp.eq.s32.totalorder %s21, 0
      %p84 = por %p82, %p83
      %p85 = scmp.ne.s32.totalorder %s73, %s74
      %p86 = scmp.eq.s32.totalorder %s22, 1
      %p87 = por %p85, %p86
      %p89 = scmp.ne.s32.totalorder %s74, %s88
      %p90 = scmp.eq.s32.totalorder %s22, 0
      %p91 = por %p89, %p90
      %s92 = ssub.s32 %s16, %s23
      %p93 = scmp.eq.s32.totalorder %s92, 0
      %s95 = sadd.s32 %s94, 1
      %s96 = scalar_select %p93, %s94, %s95
      %p99 = pneg %p93
      %p100 = scmp.eq.s32.totalorder %s16, 1
      %p101 = por %p99, %p100
      %p102 = scmp.ne.s32.totalorder %s94, %s97
      %p103 = scmp.eq.s32.totalorder %s16, 0
      %p104 = por %p102, %p103
      %p105 = scmp.ne.s32.totalorder %s94, %s97
      %p106 = scmp.eq.s32.totalorder %s21, 1
      %p107 = por %p105, %p106
      %p108 = scmp.ne.s32.totalorder %s97, %s98
      %p109 = scmp.eq.s32.totalorder %s21, 0
      %p110 = por %p108, %p109
      %p111 = scmp.ne.s32.totalorder %s97, %s98
      %p112 = scmp.eq.s32.totalorder %s22, 1
      %p113 = por %p111, %p112
      %p115 = scmp.ne.s32.totalorder %s98, %s114
      %p116 = scmp.eq.s32.totalorder %s22, 0
      %p117 = por %p115, %p116
      %p118 = scmp.le.s32.totalorder 1, %s16
      %p119 = scmp.lt.s32.totalorder %s16, 3
      %p120 = pnand %p118, %p119
      %p121 = pneg %p120
      // Predicated region
      $region9: #{tpu_custom_call.1} parent=5 // pred_check
        _
      $region10: #{tpu_custom_call.1} parent=5 // pred_check_branch
        %123 = sbr.rel (%p120) target = $region12
      $region11: #{tpu_custom_call.1} parent=5 // pred_region
        %s124 = ssub.s32 %s16, 1
        // Predicated region
        $region13: #{tpu_custom_call.1} parent=11 // pred_check
          %p125 = pneg %p63
        $region14: #{tpu_custom_call.1} parent=11 // pred_check_branch
          %127 = sbr.rel (%p125) target = $region16
        $region15: #{tpu_custom_call.1} parent=11 // pred_region
          %s129 = ssub.s32 9216, 9216
          %130 = vsyncadd [#allocation8], %s129
          %s131 = sshll.u32 [#allocation7], 4
          %s132 = int_to_ptr.vmem [resolvable:$true] %s131
          %137 = dma.hbm_to_vmem [thread:$0]  %s1, 9216, %s132, [#allocation8], 192, 192, 12
        $region16: #{tpu_custom_call.1} parent=11 // pred_fallthru
          _
        // Predicated region
        $region17: #{tpu_custom_call.1} parent=11 // pred_check
          %p138 = pneg %p84
        $region18: #{tpu_custom_call.1} parent=11 // pred_check_branch
          %140 = sbr.rel (%p138) target = $region20
        $region19: #{tpu_custom_call.1} parent=11 // pred_region
          _
        $region20: #{tpu_custom_call.1} parent=11 // pred_fallthru
          _
      $region12: #{tpu_custom_call.1} parent=5 // pred_fallthru
        _
      %p141 = scmp.lt.s32.totalorder %s16, 2
      // Predicated region
      $region21: #{tpu_custom_call.1} parent=5 // pred_check
        %p142 = pneg %p141
      $region22: #{tpu_custom_call.1} parent=5 // pred_check_branch
        %144 = sbr.rel (%p142) target = $region24
      $region23: #{tpu_custom_call.1} parent=5 // pred_region
        // Predicated region
        $region25: #{tpu_custom_call.1} parent=23 // pred_check
          %p145 = pneg %p36
        $region26: #{tpu_custom_call.1} parent=23 // pred_check_branch
          %147 = sbr.rel (%p145) target = $region28
        $region27: #{tpu_custom_call.1} parent=23 // pred_region
          %s148 = sand.u32 %s26, 1
          %s149 = scalar_lea.sflag [#allocation5], %s148
          %s150 = sand.u32 %s26, 1
          %s151 = smul.addr %s150, 256
          %s152 = scalar_lea.vmem [#allocation4], %s151
          %s154 = ssub.s32 4096, 4096
          %155 = vsyncadd %s149, %s154
          %s156 = smul.addr %s16, 32
          %s157 = smul.addr %s156, 128
          %s158 = scalar_lea.hbm %s0, %s157
          %s159 = sshll.u32 %s152, 4
          %s160 = int_to_ptr.vmem [resolvable:$true] %s159
          %165 = dma.hbm_to_vmem [thread:$0]  %s158, 4096, %s160, %s149, 128, 128, 8
        $region28: #{tpu_custom_call.1} parent=23 // pred_fallthru
          _
      $region24: #{tpu_custom_call.1} parent=5 // pred_fallthru
        _
      %p166 = scmp.le.s32.totalorder 1, %s16
      %p167 = scmp.lt.s32.totalorder %s16, 3
      %p168 = pnand %p166, %p167
      %p169 = pneg %p168
      // Predicated region
      $region29: #{tpu_custom_call.1} parent=5 // pred_check
        _
      $region30: #{tpu_custom_call.1} parent=5 // pred_check_branch
        %171 = sbr.rel (%p168) target = $region32
      $region31: #{tpu_custom_call.1} parent=5 // pred_region
        %s172 = ssub.s32 %s16, 1
        %s173 = sand.u32 %s29, 1
        %s174 = scalar_lea.sflag [#allocation5], %s173
        %s175 = sand.u32 %s29, 1
        %s176 = smul.addr %s175, 256
        %s177 = scalar_lea.vmem [#allocation4], %s176
        // Predicated region
        $region33: #{tpu_custom_call.1} parent=31 // pred_check
          %p178 = pneg %p42
        $region34: #{tpu_custom_call.1} parent=31 // pred_check_branch
          %180 = sbr.rel (%p178) target = $region36
        $region35: #{tpu_custom_call.1} parent=31 // pred_region
          %181 = dma.done %s174, 4096
        $region36: #{tpu_custom_call.1} parent=31 // pred_fallthru
          _
        // Predicated region
        $region37: #{tpu_custom_call.1} parent=31 // pred_check
          %p182 = pneg %p63
        $region38: #{tpu_custom_call.1} parent=31 // pred_check_branch
          %184 = sbr.rel (%p182) target = $region40
        $region39: #{tpu_custom_call.1} parent=31 // pred_region
          %185 = dma.done [#allocation8], 9216
        $region40: #{tpu_custom_call.1} parent=31 // pred_fallthru
          _
        %s186 = sand.u32 %s29, 1
        %s187 = scalar_lea.sflag [#allocation5], %s186
        %s188 = sand.u32 %s29, 1
        %s189 = smul.addr %s188, 256
        %s190 = scalar_lea.vmem [#allocation4], %s189
        %p191 = pneg %p42
        %p192 = pneg %p39
        %p193 = pneg %p63
        %p194 = pneg %p60
        %p195 = pneg %p84
        %p196 = pneg %p81
        %p197 = pneg %p110
        %p198 = pneg %p107
        %s199 = sand.u32 %s97, 1
        %s200 = scalar_lea.sflag [#allocation6], %s199
        %s201 = sand.u32 %s97, 1
        %s202 = smul.addr %s201, 256
        %s203 = scalar_lea.vmem [#allocation9], %s202
        %205 = vst [vmem:[#allocation2] sm:$0xf] 0
        %206 = vst [vmem:[#allocation2 + $0x4] sm:$0xf] 0
        %207 = vst [vmem:[#allocation2 + $0x8] sm:$0xf] 0
        %208 = vst [vmem:[#allocation2 + $0xc] sm:$0xf] 0
        %209 = vst [vmem:[#allocation2 + $0x10] sm:$0xf] 0
        %210 = vst [vmem:[#allocation2 + $0x14] sm:$0xf] 0
        %211 = vst [vmem:[#allocation2 + $0x18] sm:$0xf] 0
        %212 = vst [vmem:[#allocation2 + $0x1c] sm:$0xf] 0
        %213 = vst [vmem:[#allocation2 + $0x20] sm:$0xf] 0
        %214 = vst [vmem:[#allocation2 + $0x24] sm:$0xf] 0
        %215 = vst [vmem:[#allocation2 + $0x28] sm:$0xf] 0
        %216 = vst [vmem:[#allocation2 + $0x2c] sm:$0xf] 0
        %217 = vst [vmem:[#allocation2 + $0x30] sm:$0xf] 0
        %218 = vst [vmem:[#allocation2 + $0x34] sm:$0xf] 0
        %219 = vst [vmem:[#allocation2 + $0x38] sm:$0xf] 0
        %220 = vst [vmem:[#allocation2 + $0x3c] sm:$0xf] 0
        %221 = vst [vmem:[#allocation2 + $0x40] sm:$0xf] 0
        %222 = vst [vmem:[#allocation2 + $0x44] sm:$0xf] 0
        %223 = vst [vmem:[#allocation2 + $0x48] sm:$0xf] 0
        %224 = vst [vmem:[#allocation2 + $0x4c] sm:$0xf] 0
        %225 = vst [vmem:[#allocation2 + $0x50] sm:$0xf] 0
        %226 = vst [vmem:[#allocation2 + $0x54] sm:$0xf] 0
        %227 = vst [vmem:[#allocation2 + $0x58] sm:$0xf] 0
        %228 = vst [vmem:[#allocation2 + $0x5c] sm:$0xf] 0
        %229 = vst [vmem:[#allocation2 + $0x60] sm:$0xf] 0
        %230 = vst [vmem:[#allocation2 + $0x64] sm:$0xf] 0
        %231 = vst [vmem:[#allocation2 + $0x68] sm:$0xf] 0
        %232 = vst [vmem:[#allocation2 + $0x6c] sm:$0xf] 0
        %233 = vst [vmem:[#allocation2 + $0x70] sm:$0xf] 0
        %234 = vst [vmem:[#allocation2 + $0x74] sm:$0xf] 0
        %235 = vst [vmem:[#allocation2 + $0x78] sm:$0xf] 0
        %236 = vst [vmem:[#allocation2 + $0x7c] sm:$0xf] 0
        %237 = vst [vmem:[#allocation2 + $0x80] sm:$0xf] 0
        %238 = vst [vmem:[#allocation2 + $0x84] sm:$0xf] 0
        %239 = vst [vmem:[#allocation2 + $0x88] sm:$0xf] 0
        %240 = vst [vmem:[#allocation2 + $0x8c] sm:$0xf] 0
        %241 = vst [vmem:[#allocation3] sm:$0xff] 0.0
        %242 = vst [vmem:[#allocation3 + $0x8] sm:$0xff] 0.0
        %243 = vst [vmem:[#allocation3 + $0x10] sm:$0xff] 0.0
        %244 = vst [vmem:[#allocation3 + $0x18] sm:$0xff] 0.0
        %245 = vst [vmem:[#allocation3 + $0x20] sm:$0xff] 0.0
        %246 = vst [vmem:[#allocation3 + $0x28] sm:$0xff] 0.0
        %247 = vst [vmem:[#allocation3 + $0x30] sm:$0xff] 0.0
        %248 = vst [vmem:[#allocation3 + $0x38] sm:$0xff] 0.0
        %249 = vst [vmem:[#allocation3 + $0x40] sm:$0xff] 0.0
        %250 = vst [vmem:[#allocation3 + $0x48] sm:$0xff] 0.0
        %251 = vst [vmem:[#allocation3 + $0x50] sm:$0xff] 0.0
        %252 = vst [vmem:[#allocation3 + $0x58] sm:$0xff] 0.0
        %253 = vst [vmem:[#allocation3 + $0x60] sm:$0xff] 0.0
        %254 = vst [vmem:[#allocation3 + $0x68] sm:$0xff] 0.0
        %255 = vst [vmem:[#allocation3 + $0x70] sm:$0xff] 0.0
        %256 = vst [vmem:[#allocation3 + $0x78] sm:$0xff] 0.0
        %257 = vst [vmem:[#allocation3 + $0x80] sm:$0xff] 0.0
        %258 = vst [vmem:[#allocation3 + $0x88] sm:$0xff] 0.0
        %259 = vst [vmem:[#allocation3 + $0x90] sm:$0xff] 0.0
        %260 = vst [vmem:[#allocation3 + $0x98] sm:$0xff] 0.0
        %261 = vst [vmem:[#allocation3 + $0xa0] sm:$0xff] 0.0
        %262 = vst [vmem:[#allocation3 + $0xa8] sm:$0xff] 0.0
        %263 = vst [vmem:[#allocation3 + $0xb0] sm:$0xff] 0.0
        %264 = vst [vmem:[#allocation3 + $0xb8] sm:$0xff] 0.0
        %265 = vst [vmem:[#allocation3 + $0xc0] sm:$0xff] 0.0
        %266 = vst [vmem:[#allocation3 + $0xc8] sm:$0xff] 0.0
        %267 = vst [vmem:[#allocation3 + $0xd0] sm:$0xff] 0.0
        %268 = vst [vmem:[#allocation3 + $0xd8] sm:$0xff] 0.0
        %269 = vst [vmem:[#allocation3 + $0xe0] sm:$0xff] 0.0
        %270 = vst [vmem:[#allocation3 + $0xe8] sm:$0xff] 0.0
        %271 = vst [vmem:[#allocation3 + $0xf0] sm:$0xff] 0.0
        %272 = vst [vmem:[#allocation3 + $0xf8] sm:$0xff] 0.0
        %273 = vst [vmem:[#allocation3 + $0x100] sm:$0xff] 0.0
        %274 = vst [vmem:[#allocation3 + $0x108] sm:$0xff] 0.0
        %275 = vst [vmem:[#allocation3 + $0x110] sm:$0xff] 0.0
        %276 = vst [vmem:[#allocation3 + $0x118] sm:$0xff] 0.0
        %277 = vst [vmem:[#allocation3 + $0x120] sm:$0xff] 0.0
        %278 = vst [vmem:[#allocation3 + $0x128] sm:$0xff] 0.0
        %279 = vst [vmem:[#allocation3 + $0x130] sm:$0xff] 0.0
        %280 = vst [vmem:[#allocation3 + $0x138] sm:$0xff] 0.0
        %281 = vst [vmem:[#allocation3 + $0x140] sm:$0xff] 0.0
        %282 = vst [vmem:[#allocation3 + $0x148] sm:$0xff] 0.0
        %283 = vst [vmem:[#allocation3 + $0x150] sm:$0xff] 0.0
        %284 = vst [vmem:[#allocation3 + $0x158] sm:$0xff] 0.0
        %285 = vst [vmem:[#allocation3 + $0x160] sm:$0xff] 0.0
        %286 = vst [vmem:[#allocation3 + $0x168] sm:$0xff] 0.0
        %287 = vst [vmem:[#allocation3 + $0x170] sm:$0xff] 0.0
        %288 = vst [vmem:[#allocation3 + $0x178] sm:$0xff] 0.0
        %289 = vst [vmem:[%s203] sm:$0xff] 0.0
        %290 = vst [vmem:[%s203 + $0x8] sm:$0xff] 0.0
        %291 = vst [vmem:[%s203 + $0x10] sm:$0xff] 0.0
        %292 = vst [vmem:[%s203 + $0x18] sm:$0xff] 0.0
        %293 = vst [vmem:[%s203 + $0x20] sm:$0xff] 0.0
        %294 = vst [vmem:[%s203 + $0x28] sm:$0xff] 0.0
        %295 = vst [vmem:[%s203 + $0x30] sm:$0xff] 0.0
        %296 = vst [vmem:[%s203 + $0x38] sm:$0xff] 0.0
        %297 = vst [vmem:[%s203 + $0x40] sm:$0xff] 0.0
        %298 = vst [vmem:[%s203 + $0x48] sm:$0xff] 0.0
        %299 = vst [vmem:[%s203 + $0x50] sm:$0xff] 0.0
        %300 = vst [vmem:[%s203 + $0x58] sm:$0xff] 0.0
        %301 = vst [vmem:[%s203 + $0x60] sm:$0xff] 0.0
        %302 = vst [vmem:[%s203 + $0x68] sm:$0xff] 0.0
        %303 = vst [vmem:[%s203 + $0x70] sm:$0xff] 0.0
        %304 = vst [vmem:[%s203 + $0x78] sm:$0xff] 0.0
        %305 = vst [vmem:[%s203 + $0x80] sm:$0xff] 0.0
        %306 = vst [vmem:[%s203 + $0x88] sm:$0xff] 0.0
        %307 = vst [vmem:[%s203 + $0x90] sm:$0xff] 0.0
        %308 = vst [vmem:[%s203 + $0x98] sm:$0xff] 0.0
        %309 = vst [vmem:[%s203 + $0xa0] sm:$0xff] 0.0
        %310 = vst [vmem:[%s203 + $0xa8] sm:$0xff] 0.0
        %311 = vst [vmem:[%s203 + $0xb0] sm:$0xff] 0.0
        %312 = vst [vmem:[%s203 + $0xb8] sm:$0xff] 0.0
        %313 = vst [vmem:[%s203 + $0xc0] sm:$0xff] 0.0
        %314 = vst [vmem:[%s203 + $0xc8] sm:$0xff] 0.0
        %315 = vst [vmem:[%s203 + $0xd0] sm:$0xff] 0.0
        %316 = vst [vmem:[%s203 + $0xd8] sm:$0xff] 0.0
        %317 = vst [vmem:[%s203 + $0xe0] sm:$0xff] 0.0
        %318 = vst [vmem:[%s203 + $0xe8] sm:$0xff] 0.0
        %319 = vst [vmem:[%s203 + $0xf0] sm:$0xff] 0.0
        %320 = vst [vmem:[%s203 + $0xf8] sm:$0xff] 0.0
        %v321 = vld [vmem:[%s177] sm:$0xff]
        %v322 = vld [vmem:[%s177 + $0x8] sm:$0xff]
        %v323 = vld [vmem:[%s177 + $0x10] sm:$0xff]
        %v324 = vld [vmem:[%s177 + $0x18] sm:$0xff]
        %v325 = vld [vmem:[%s177 + $0x20] sm:$0xff]
        %v326 = vld [vmem:[%s177 + $0x28] sm:$0xff]
        %v327 = vld [vmem:[%s177 + $0x30] sm:$0xff]
        %v328 = vld [vmem:[%s177 + $0x38] sm:$0xff]
        %v329 = vld [vmem:[%s177 + $0x40] sm:$0xff]
        %v330 = vld [vmem:[%s177 + $0x48] sm:$0xff]
        %v331 = vld [vmem:[%s177 + $0x50] sm:$0xff]
        %v332 = vld [vmem:[%s177 + $0x58] sm:$0xff]
        %v333 = vld [vmem:[%s177 + $0x60] sm:$0xff]
        %v334 = vld [vmem:[%s177 + $0x68] sm:$0xff]
        %v335 = vld [vmem:[%s177 + $0x70] sm:$0xff]
        %v336 = vld [vmem:[%s177 + $0x78] sm:$0xff]
        %v337 = vld [vmem:[%s177 + $0x80] sm:$0xff]
        %v338 = vld [vmem:[%s177 + $0x88] sm:$0xff]
        %v339 = vld [vmem:[%s177 + $0x90] sm:$0xff]
        %v340 = vld [vmem:[%s177 + $0x98] sm:$0xff]
        %v341 = vld [vmem:[%s177 + $0xa0] sm:$0xff]
        %v342 = vld [vmem:[%s177 + $0xa8] sm:$0xff]
        %v343 = vld [vmem:[%s177 + $0xb0] sm:$0xff]
        %v344 = vld [vmem:[%s177 + $0xb8] sm:$0xff]
        %v345 = vld [vmem:[%s177 + $0xc0] sm:$0xff]
        %v346 = vld [vmem:[%s177 + $0xc8] sm:$0xff]
        %v347 = vld [vmem:[%s177 + $0xd0] sm:$0xff]
        %v348 = vld [vmem:[%s177 + $0xd8] sm:$0xff]
        %v349 = vld [vmem:[%s177 + $0xe0] sm:$0xff]
        %v350 = vld [vmem:[%s177 + $0xe8] sm:$0xff]
        %v351 = vld [vmem:[%s177 + $0xf0] sm:$0xff]
        %v352 = vld [vmem:[%s177 + $0xf8] sm:$0xff]
        %v353 = vld [vmem:[%s2] sm:$0x1]
        %v355 = vlaneseq
        %v356 = vshrl.u32 %v355, 7
        %v357 = vsub.s32 0, %v356
        %v358 = vrot.slane %v353, %v357
        %v360 = vadd.f32 %v321, %v358
        %v361 = vadd.f32 %v322, %v358
        %v362 = vadd.f32 %v323, %v358
        %v363 = vadd.f32 %v324, %v358
        %v364 = vadd.f32 %v325, %v358
        %v365 = vadd.f32 %v326, %v358
        %v366 = vadd.f32 %v327, %v358
        %v367 = vadd.f32 %v328, %v358
        %v368 = vadd.f32 %v329, %v358
        %v369 = vadd.f32 %v330, %v358
        %v370 = vadd.f32 %v331, %v358
        %v371 = vadd.f32 %v332, %v358
        %v372 = vadd.f32 %v333, %v358
        %v373 = vadd.f32 %v334, %v358
        %v374 = vadd.f32 %v335, %v358
        %v375 = vadd.f32 %v336, %v358
        %v376 = vadd.f32 %v337, %v358
        %v377 = vadd.f32 %v338, %v358
        %v378 = vadd.f32 %v339, %v358
        %v379 = vadd.f32 %v340, %v358
        %v380 = vadd.f32 %v341, %v358
        %v381 = vadd.f32 %v342, %v358
        %v382 = vadd.f32 %v343, %v358
        %v383 = vadd.f32 %v344, %v358
        %v384 = vadd.f32 %v345, %v358
        %v385 = vadd.f32 %v346, %v358
        %v386 = vadd.f32 %v347, %v358
        %v387 = vadd.f32 %v348, %v358
        %v388 = vadd.f32 %v349, %v358
        %v389 = vadd.f32 %v350, %v358
        %v390 = vadd.f32 %v351, %v358
        %v391 = vadd.f32 %v352, %v358
        loop: start=0, step=1, limit=5
        $region41: #{tpu_custom_call.1} parent=31 // loop_pre_header
          _
        $region42: #{tpu_custom_call.1} parent=31 // loop_header
          %s393 = sphi 0, %s397
          %p394 = scmp.ge.s32.totalorder %s393, 5
        $region43: #{tpu_custom_call.1} parent=31 // loop_header_branch
          %396 = sbr.rel (%p394) target = $region47
        $region44: #{tpu_custom_call.1} parent=31 // loop_body
          %v398 = vld [vmem:[#allocation2] sm:$0xf]
          %v399 = vld [vmem:[#allocation2 + $0x4] sm:$0xf]
          %v400 = vld [vmem:[#allocation2 + $0x8] sm:$0xf]
          %v401 = vld [vmem:[#allocation2 + $0xc] sm:$0xf]
          %v402 = vld [vmem:[#allocation2 + $0x10] sm:$0xf]
          %v403 = vld [vmem:[#allocation2 + $0x14] sm:$0xf]
          %v404 = vld [vmem:[#allocation2 + $0x18] sm:$0xf]
          %v405 = vld [vmem:[#allocation2 + $0x1c] sm:$0xf]
          %v406 = vld [vmem:[#allocation2 + $0x20] sm:$0xf]
          %v407 = vld [vmem:[#allocation2 + $0x24] sm:$0xf]
          %v408 = vld [vmem:[#allocation2 + $0x28] sm:$0xf]
          %v409 = vld [vmem:[#allocation2 + $0x2c] sm:$0xf]
          %v410 = vld [vmem:[#allocation2 + $0x30] sm:$0xf]
          %v411 = vld [vmem:[#allocation2 + $0x34] sm:$0xf]
          %v412 = vld [vmem:[#allocation2 + $0x38] sm:$0xf]
          %v413 = vld [vmem:[#allocation2 + $0x3c] sm:$0xf]
          %v414 = vld [vmem:[#allocation2 + $0x40] sm:$0xf]
          %v415 = vld [vmem:[#allocation2 + $0x44] sm:$0xf]
          %v416 = vld [vmem:[#allocation2 + $0x48] sm:$0xf]
          %v417 = vld [vmem:[#allocation2 + $0x4c] sm:$0xf]
          %v418 = vld [vmem:[#allocation2 + $0x50] sm:$0xf]
          %v419 = vld [vmem:[#allocation2 + $0x54] sm:$0xf]
          %v420 = vld [vmem:[#allocation2 + $0x58] sm:$0xf]
          %v421 = vld [vmem:[#allocation2 + $0x5c] sm:$0xf]
          %v422 = vld [vmem:[#allocation2 + $0x60] sm:$0xf]
          %v423 = vld [vmem:[#allocation2 + $0x64] sm:$0xf]
          %v424 = vld [vmem:[#allocation2 + $0x68] sm:$0xf]
          %v425 = vld [vmem:[#allocation2 + $0x6c] sm:$0xf]
          %v426 = vld [vmem:[#allocation2 + $0x70] sm:$0xf]
          %v427 = vld [vmem:[#allocation2 + $0x74] sm:$0xf]
          %v428 = vld [vmem:[#allocation2 + $0x78] sm:$0xf]
          %v429 = vld [vmem:[#allocation2 + $0x7c] sm:$0xf]
          %v430 = vld [vmem:[#allocation7] sm:$0xff]
          %v431 = vld [vmem:[#allocation7 + $0x8] sm:$0xf]
          %v432 = vld [vmem:[#allocation7 + $0xc] sm:$0xff]
          %v433 = vld [vmem:[#allocation7 + $0x14] sm:$0xf]
          %v434 = vld [vmem:[#allocation7 + $0x18] sm:$0xff]
          %v435 = vld [vmem:[#allocation7 + $0x20] sm:$0xf]
          %v436 = vld [vmem:[#allocation7 + $0x24] sm:$0xff]
          %v437 = vld [vmem:[#allocation7 + $0x2c] sm:$0xf]
          %v438 = vld [vmem:[#allocation7 + $0x30] sm:$0xff]
          %v439 = vld [vmem:[#allocation7 + $0x38] sm:$0xf]
          %v440 = vld [vmem:[#allocation7 + $0x3c] sm:$0xff]
          %v441 = vld [vmem:[#allocation7 + $0x44] sm:$0xf]
          %v442 = vld [vmem:[#allocation7 + $0x48] sm:$0xff]
          %v443 = vld [vmem:[#allocation7 + $0x50] sm:$0xf]
          %v444 = vld [vmem:[#allocation7 + $0x54] sm:$0xff]
          %v445 = vld [vmem:[#allocation7 + $0x5c] sm:$0xf]
          %v446 = vld [vmem:[#allocation7 + $0x60] sm:$0xff]
          %v447 = vld [vmem:[#allocation7 + $0x68] sm:$0xf]
          %v448 = vld [vmem:[#allocation7 + $0x6c] sm:$0xff]
          %v449 = vld [vmem:[#allocation7 + $0x74] sm:$0xf]
          %v450 = vld [vmem:[#allocation7 + $0x78] sm:$0xff]
          %v451 = vld [vmem:[#allocation7 + $0x80] sm:$0xf]
          %v452 = vld [vmem:[#allocation7 + $0x84] sm:$0xff]
          %v453 = vld [vmem:[#allocation7 + $0x8c] sm:$0xf]
          %v454 = vld [vmem:[#allocation7 + $0x90] sm:$0xff]
          %v455 = vld [vmem:[#allocation7 + $0x98] sm:$0xf]
          %v456 = vld [vmem:[#allocation7 + $0x9c] sm:$0xff]
          %v457 = vld [vmem:[#allocation7 + $0xa4] sm:$0xf]
          %v458 = vld [vmem:[#allocation7 + $0xa8] sm:$0xff]
          %v459 = vld [vmem:[#allocation7 + $0xb0] sm:$0xf]
          %v460 = vld [vmem:[#allocation7 + $0xb4] sm:$0xff]
          %v461 = vld [vmem:[#allocation7 + $0xbc] sm:$0xf]
          %v494 = vunpack.c.l.b16 %v398
          %v495 = vunpack.c.l.b16 %v399
          %v496 = vunpack.c.l.b16 %v400
          %v497 = vunpack.c.l.b16 %v401
          %v498 = vunpack.c.l.b16 %v402
          %v499 = vunpack.c.l.b16 %v403
          %v500 = vunpack.c.l.b16 %v404
          %v501 = vunpack.c.l.b16 %v405
          %v502 = vunpack.c.l.b16 %v406
          %v503 = vunpack.c.l.b16 %v407
          %v504 = vunpack.c.l.b16 %v408
          %v505 = vunpack.c.l.b16 %v409
          %v506 = vunpack.c.l.b16 %v410
          %v507 = vunpack.c.l.b16 %v411
          %v508 = vunpack.c.l.b16 %v412
          %v509 = vunpack.c.l.b16 %v413
          %v510 = vunpack.c.l.b16 %v414
          %v511 = vunpack.c.l.b16 %v415
          %v512 = vunpack.c.l.b16 %v416
          %v513 = vunpack.c.l.b16 %v417
          %v514 = vunpack.c.l.b16 %v418
          %v515 = vunpack.c.l.b16 %v419
          %v516 = vunpack.c.l.b16 %v420
          %v517 = vunpack.c.l.b16 %v421
          %v518 = vunpack.c.l.b16 %v422
          %v519 = vunpack.c.l.b16 %v423
          %v520 = vunpack.c.l.b16 %v424
          %v521 = vunpack.c.l.b16 %v425
          %v522 = vunpack.c.l.b16 %v426
          %v523 = vunpack.c.l.b16 %v427
          %v524 = vunpack.c.l.b16 %v428
          %v525 = vunpack.c.l.b16 %v429
          %v526 = vpack.c.b16 %v495, %v494
          %v527 = vpack.c.b16 %v497, %v496
          %v528 = vpack.c.b16 %v499, %v498
          %v529 = vpack.c.b16 %v501, %v500
          %v530 = vpack.c.b16 %v503, %v502
          %v531 = vpack.c.b16 %v505, %v504
          %v532 = vpack.c.b16 %v507, %v506
          %v533 = vpack.c.b16 %v509, %v508
          %v534 = vpack.c.b16 %v511, %v510
          %v535 = vpack.c.b16 %v513, %v512
          %v536 = vpack.c.b16 %v515, %v514
          %v537 = vpack.c.b16 %v517, %v516
          %v538 = vpack.c.b16 %v519, %v518
          %v539 = vpack.c.b16 %v521, %v520
          %v540 = vpack.c.b16 %v523, %v522
          %v541 = vpack.c.b16 %v525, %v524
          %v590 = vunpack.c.l.b16 %v430
          %v591 = vunpack.c.h.b16 %v430
          %v592 = vunpack.c.l.b16 %v431
          %v593 = vunpack.c.l.b16 %v432
          %v594 = vunpack.c.h.b16 %v432
          %v595 = vunpack.c.l.b16 %v433
          %v596 = vunpack.c.l.b16 %v434
          %v597 = vunpack.c.h.b16 %v434
          %v598 = vunpack.c.l.b16 %v435
          %v599 = vunpack.c.l.b16 %v436
          %v600 = vunpack.c.h.b16 %v436
          %v601 = vunpack.c.l.b16 %v437
          %v602 = vunpack.c.l.b16 %v438
          %v603 = vunpack.c.h.b16 %v438
          %v604 = vunpack.c.l.b16 %v439
          %v605 = vunpack.c.l.b16 %v440
          %v606 = vunpack.c.h.b16 %v440
          %v607 = vunpack.c.l.b16 %v441
          %v608 = vunpack.c.l.b16 %v442
          %v609 = vunpack.c.h.b16 %v442
          %v610 = vunpack.c.l.b16 %v443
          %v611 = vunpack.c.l.b16 %v444
          %v612 = vunpack.c.h.b16 %v444
          %v613 = vunpack.c.l.b16 %v445
          %v614 = vunpack.c.l.b16 %v446
          %v615 = vunpack.c.h.b16 %v446
          %v616 = vunpack.c.l.b16 %v447
          %v617 = vunpack.c.l.b16 %v448
          %v618 = vunpack.c.h.b16 %v448
          %v619 = vunpack.c.l.b16 %v449
          %v620 = vunpack.c.l.b16 %v450
          %v621 = vunpack.c.h.b16 %v450
          %v622 = vunpack.c.l.b16 %v451
          %v623 = vunpack.c.l.b16 %v452
          %v624 = vunpack.c.h.b16 %v452
          %v625 = vunpack.c.l.b16 %v453
          %v626 = vunpack.c.l.b16 %v454
          %v627 = vunpack.c.h.b16 %v454
          %v628 = vunpack.c.l.b16 %v455
          %v629 = vunpack.c.l.b16 %v456
          %v630 = vunpack.c.h.b16 %v456
          %v631 = vunpack.c.l.b16 %v457
          %v632 = vunpack.c.l.b16 %v458
          %v633 = vunpack.c.h.b16 %v458
          %v634 = vunpack.c.l.b16 %v459
          %v635 = vunpack.c.l.b16 %v460
          %v636 = vunpack.c.h.b16 %v460
          %v637 = vunpack.c.l.b16 %v461
          %v638 = vpack.c.b16 %v593, %v590
          %v639 = vpack.c.b16 %v594, %v591
          %v640 = vpack.c.b16 %v595, %v592
          %v641 = vpack.c.b16 %v599, %v596
          %v642 = vpack.c.b16 %v600, %v597
          %v643 = vpack.c.b16 %v601, %v598
          %v644 = vpack.c.b16 %v605, %v602
          %v645 = vpack.c.b16 %v606, %v603
          %v646 = vpack.c.b16 %v607, %v604
          %v647 = vpack.c.b16 %v611, %v608
          %v648 = vpack.c.b16 %v612, %v609
          %v649 = vpack.c.b16 %v613, %v610
          %v650 = vpack.c.b16 %v617, %v614
          %v651 = vpack.c.b16 %v618, %v615
          %v652 = vpack.c.b16 %v619, %v616
          %v653 = vpack.c.b16 %v623, %v620
          %v654 = vpack.c.b16 %v624, %v621
          %v655 = vpack.c.b16 %v625, %v622
          %v656 = vpack.c.b16 %v629, %v626
          %v657 = vpack.c.b16 %v630, %v627
          %v658 = vpack.c.b16 %v631, %v628
          %v659 = vpack.c.b16 %v635, %v632
          %v660 = vpack.c.b16 %v636, %v633
          %v661 = vpack.c.b16 %v637, %v634
          %686 = vmatprep.subr.bf16.mxu0 %v660
          %687 = vmatpush1.bf16.msra.mxu0 %v659
          %688 = vmatprep.subr.bf16.mxu0 %v657
          %689 = vmatpush1.bf16.msra.mxu0 %v656
          %690 = vmatprep.subr.bf16.mxu0 %v654
          %691 = vmatpush1.bf16.msra.mxu0 %v653
          %692 = vmatprep.subr.bf16.mxu0 %v651
          %693 = vmatpush1.bf16.msra.mxu0 %v650
          %694 = vmatprep.subr.bf16.mxu0 %v648
          %695 = vmatpush1.bf16.msra.mxu0 %v647
          %696 = vmatprep.subr.bf16.mxu0 %v645
          %697 = vmatpush1.bf16.msra.mxu0 %v644
          %698 = vmatprep.subr.bf16.mxu0 %v642
          %699 = vmatpush1.bf16.msra.mxu0 %v641
          %700 = vmatprep.subr.bf16.mxu0 %v639
          %701 = vmatpush1.bf16.msra.mxu0 %v638
          %702 = vmatprep.subr.bf16.mxu0 0
          %703 = vmatpush2.bf16.msra.mxu0 0
          %704 = vmatprep.subr.bf16.mxu0 0
          %705 = vmatpush2.bf16.msra.mxu0 0
          %706 = vmatprep.subr.bf16.mxu0 0
          %707 = vmatpush2.bf16.msra.mxu0 0
          %708 = vmatprep.subr.bf16.mxu0 0
          %709 = vmatpush2.bf16.msra.mxu0 0
          %710 = vmatprep.subr.bf16.mxu0 0
          %711 = vmatpush2.bf16.msra.mxu0 0
          %712 = vmatprep.subr.bf16.mxu0 0
          %713 = vmatpush2.bf16.msra.mxu0 0
          %714 = vmatprep.subr.bf16.mxu0 0
          %715 = vmatpush2.bf16.msra.mxu0 0
          %716 = vmatprep.subr.bf16.mxu0 0
          %717 = vmatpush2.bf16.msra.mxu0 0
          %718 = vmatprep.mubr.bf16.mxu0 0
          %719 = vmatmul.mubr.bf16.gmra.mxu0 %v526
          %v720 = vpop.f32.mrf.mxu0
          %v721 = vadd.f32 0.0, %v720
          %v722 = vpop.f32.mrf.mxu0
          %v723 = vadd.f32 0.0, %v722
          %v724 = vpop.f32.mrf.mxu0
          %v725 = vadd.f32 0.0, %v724
          %v726 = vpop.f32.mrf.mxu0
          %v727 = vadd.f32 0.0, %v726
          %728 = vmatprep.mubr.bf16.mxu0 0
          %729 = vmatmul.mubr.bf16.gmra.mxu0 %v527
          %v730 = vpop.f32.mrf.mxu0
          %v731 = vadd.f32 0.0, %v730
          %v732 = vpop.f32.mrf.mxu0
          %v733 = vadd.f32 0.0, %v732
          %v734 = vpop.f32.mrf.mxu0
          %v735 = vadd.f32 0.0, %v734
          %v736 = vpop.f32.mrf.mxu0
          %v737 = vadd.f32 0.0, %v736
          %738 = vmatprep.mubr.bf16.mxu0 0
          %739 = vmatmul.mubr.bf16.gmra.mxu0 %v528
          %v740 = vpop.f32.mrf.mxu0
          %v741 = vadd.f32 0.0, %v740
          %v742 = vpop.f32.mrf.mxu0
          %v743 = vadd.f32 0.0, %v742
          %v744 = vpop.f32.mrf.mxu0
          %v745 = vadd.f32 0.0, %v744
          %v746 = vpop.f32.mrf.mxu0
          %v747 = vadd.f32 0.0, %v746
          %748 = vmatprep.mubr.bf16.mxu0 0
          %749 = vmatmul.mubr.bf16.gmra.mxu0 %v529
          %v750 = vpop.f32.mrf.mxu0
          %v751 = vadd.f32 0.0, %v750
          %v752 = vpop.f32.mrf.mxu0
          %v753 = vadd.f32 0.0, %v752
          %v754 = vpop.f32.mrf.mxu0
          %v755 = vadd.f32 0.0, %v754
          %v756 = vpop.f32.mrf.mxu0
          %v757 = vadd.f32 0.0, %v756
          %758 = vmatprep.mubr.bf16.mxu0 0
          %759 = vmatmul.mubr.bf16.gmra.mxu0 %v530
          %v760 = vpop.f32.mrf.mxu0
          %v761 = vadd.f32 0.0, %v760
          %v762 = vpop.f32.mrf.mxu0
          %v763 = vadd.f32 0.0, %v762
          %v764 = vpop.f32.mrf.mxu0
          %v765 = vadd.f32 0.0, %v764
          %v766 = vpop.f32.mrf.mxu0
          %v767 = vadd.f32 0.0, %v766
          %768 = vmatprep.mubr.bf16.mxu0 0
          %769 = vmatmul.mubr.bf16.gmra.mxu0 %v531
          %v770 = vpop.f32.mrf.mxu0
          %v771 = vadd.f32 0.0, %v770
          %v772 = vpop.f32.mrf.mxu0
          %v773 = vadd.f32 0.0, %v772
          %v774 = vpop.f32.mrf.mxu0
          %v775 = vadd.f32 0.0, %v774
          %v776 = vpop.f32.mrf.mxu0
          %v777 = vadd.f32 0.0, %v776
          %778 = vmatprep.mubr.bf16.mxu0 0
          %779 = vmatmul.mubr.bf16.gmra.mxu0 %v532
          %v780 = vpop.f32.mrf.mxu0
          %v781 = vadd.f32 0.0, %v780
          %v782 = vpop.f32.mrf.mxu0
          %v783 = vadd.f32 0.0, %v782
          %v784 = vpop.f32.mrf.mxu0
          %v785 = vadd.f32 0.0, %v784
          %v786 = vpop.f32.mrf.mxu0
          %v787 = vadd.f32 0.0, %v786
          %788 = vmatprep.mubr.bf16.mxu0 0
          %789 = vmatmul.mubr.bf16.gmra.mxu0 %v533
          %v790 = vpop.f32.mrf.mxu0
          %v791 = vadd.f32 0.0, %v790
          %v792 = vpop.f32.mrf.mxu0
          %v793 = vadd.f32 0.0, %v792
          %v794 = vpop.f32.mrf.mxu0
          %v795 = vadd.f32 0.0, %v794
          %v796 = vpop.f32.mrf.mxu0
          %v797 = vadd.f32 0.0, %v796
          %798 = vmatprep.mubr.bf16.mxu0 0
          %799 = vmatmul.mubr.bf16.gmra.mxu0 %v534
          %v800 = vpop.f32.mrf.mxu0
          %v801 = vadd.f32 0.0, %v800
          %v802 = vpop.f32.mrf.mxu0
          %v803 = vadd.f32 0.0, %v802
          %v804 = vpop.f32.mrf.mxu0
          %v805 = vadd.f32 0.0, %v804
          %v806 = vpop.f32.mrf.mxu0
          %v807 = vadd.f32 0.0, %v806
          %808 = vmatprep.mubr.bf16.mxu0 0
          %809 = vmatmul.mubr.bf16.gmra.mxu0 %v535
          %v810 = vpop.f32.mrf.mxu0
          %v811 = vadd.f32 0.0, %v810
          %v812 = vpop.f32.mrf.mxu0
          %v813 = vadd.f32 0.0, %v812
          %v814 = vpop.f32.mrf.mxu0
          %v815 = vadd.f32 0.0, %v814
          %v816 = vpop.f32.mrf.mxu0
          %v817 = vadd.f32 0.0, %v816
          %818 = vmatprep.mubr.bf16.mxu0 0
          %819 = vmatmul.mubr.bf16.gmra.mxu0 %v536
          %v820 = vpop.f32.mrf.mxu0
          %v821 = vadd.f32 0.0, %v820
          %v822 = vpop.f32.mrf.mxu0
          %v823 = vadd.f32 0.0, %v822
          %v824 = vpop.f32.mrf.mxu0
          %v825 = vadd.f32 0.0, %v824
          %v826 = vpop.f32.mrf.mxu0
          %v827 = vadd.f32 0.0, %v826
          %828 = vmatprep.mubr.bf16.mxu0 0
          %829 = vmatmul.mubr.bf16.gmra.mxu0 %v537
          %v830 = vpop.f32.mrf.mxu0
          %v831 = vadd.f32 0.0, %v830
          %v832 = vpop.f32.mrf.mxu0
          %v833 = vadd.f32 0.0, %v832
          %v834 = vpop.f32.mrf.mxu0
          %v835 = vadd.f32 0.0, %v834
          %v836 = vpop.f32.mrf.mxu0
          %v837 = vadd.f32 0.0, %v836
          %838 = vmatprep.mubr.bf16.mxu0 0
          %839 = vmatmul.mubr.bf16.gmra.mxu0 %v538
          %v840 = vpop.f32.mrf.mxu0
          %v841 = vadd.f32 0.0, %v840
          %v842 = vpop.f32.mrf.mxu0
          %v843 = vadd.f32 0.0, %v842
          %v844 = vpop.f32.mrf.mxu0
          %v845 = vadd.f32 0.0, %v844
          %v846 = vpop.f32.mrf.mxu0
          %v847 = vadd.f32 0.0, %v846
          %848 = vmatprep.mubr.bf16.mxu0 0
          %849 = vmatmul.mubr.bf16.gmra.mxu0 %v539
          %v850 = vpop.f32.mrf.mxu0
          %v851 = vadd.f32 0.0, %v850
          %v852 = vpop.f32.mrf.mxu0
          %v853 = vadd.f32 0.0, %v852
          %v854 = vpop.f32.mrf.mxu0
          %v855 = vadd.f32 0.0, %v854
          %v856 = vpop.f32.mrf.mxu0
          %v857 = vadd.f32 0.0, %v856
          %858 = vmatprep.mubr.bf16.mxu0 0
          %859 = vmatmul.mubr.bf16.gmra.mxu0 %v540
          %v860 = vpop.f32.mrf.mxu0
          %v861 = vadd.f32 0.0, %v860
          %v862 = vpop.f32.mrf.mxu0
          %v863 = vadd.f32 0.0, %v862
          %v864 = vpop.f32.mrf.mxu0
          %v865 = vadd.f32 0.0, %v864
          %v866 = vpop.f32.mrf.mxu0
          %v867 = vadd.f32 0.0, %v866
          %868 = vmatprep.mubr.bf16.mxu0 0
          %869 = vmatmul.mubr.bf16.gmra.mxu0 %v541
          %v870 = vpop.f32.mrf.mxu0
          %v871 = vadd.f32 0.0, %v870
          %v872 = vpop.f32.mrf.mxu0
          %v873 = vadd.f32 0.0, %v872
          %v874 = vpop.f32.mrf.mxu0
          %v875 = vadd.f32 0.0, %v874
          %v876 = vpop.f32.mrf.mxu0
          %v877 = vadd.f32 0.0, %v876
          %878 = vdwg.mxu0
          %879 = vmatprep.subr.bf16.mxu0 0
          %880 = vmatpush1.bf16.msra.mxu0 %v661
          %881 = vmatprep.subr.bf16.mxu0 0
          %882 = vmatpush1.bf16.msra.mxu0 %v658
          %883 = vmatprep.subr.bf16.mxu0 0
          %884 = vmatpush1.bf16.msra.mxu0 %v655
          %885 = vmatprep.subr.bf16.mxu0 0
          %886 = vmatpush1.bf16.msra.mxu0 %v652
          %887 = vmatprep.subr.bf16.mxu0 0
          %888 = vmatpush1.bf16.msra.mxu0 %v649
          %889 = vmatprep.subr.bf16.mxu0 0
          %890 = vmatpush1.bf16.msra.mxu0 %v646
          %891 = vmatprep.subr.bf16.mxu0 0
          %892 = vmatpush1.bf16.msra.mxu0 %v643
          %893 = vmatprep.subr.bf16.mxu0 0
          %894 = vmatpush1.bf16.msra.mxu0 %v640
          %895 = vmatprep.subr.bf16.mxu0 0
          %896 = vmatpush2.bf16.msra.mxu0 0
          %897 = vmatprep.subr.bf16.mxu0 0
          %898 = vmatpush2.bf16.msra.mxu0 0
          %899 = vmatprep.subr.bf16.mxu0 0
          %900 = vmatpush2.bf16.msra.mxu0 0
          %901 = vmatprep.subr.bf16.mxu0 0
          %902 = vmatpush2.bf16.msra.mxu0 0
          %903 = vmatprep.subr.bf16.mxu0 0
          %904 = vmatpush2.bf16.msra.mxu0 0
          %905 = vmatprep.subr.bf16.mxu0 0
          %906 = vmatpush2.bf16.msra.mxu0 0
          %907 = vmatprep.subr.bf16.mxu0 0
          %908 = vmatpush2.bf16.msra.mxu0 0
          %909 = vmatprep.subr.bf16.mxu0 0
          %910 = vmatpush2.bf16.msra.mxu0 0
          %911 = vmatprep.mubr.bf16.mxu0 0
          %912 = vmatmul.mubr.bf16.gmra.mxu0 %v526
          %v913 = vpop.f32.mrf.mxu0
          %v914 = vadd.f32 0.0, %v913
          %v915 = vpop.f32.mrf.mxu0
          %v916 = vpop.f32.mrf.mxu0
          %v917 = vadd.f32 0.0, %v916
          %v918 = vpop.f32.mrf.mxu0
          %919 = vmatprep.mubr.bf16.mxu0 0
          %920 = vmatmul.mubr.bf16.gmra.mxu0 %v527
          %v921 = vpop.f32.mrf.mxu0
          %v922 = vadd.f32 0.0, %v921
          %v923 = vpop.f32.mrf.mxu0
          %v924 = vpop.f32.mrf.mxu0
          %v925 = vadd.f32 0.0, %v924
          %v926 = vpop.f32.mrf.mxu0
          %927 = vmatprep.mubr.bf16.mxu0 0
          %928 = vmatmul.mubr.bf16.gmra.mxu0 %v528
          %v929 = vpop.f32.mrf.mxu0
          %v930 = vadd.f32 0.0, %v929
          %v931 = vpop.f32.mrf.mxu0
          %v932 = vpop.f32.mrf.mxu0
          %v933 = vadd.f32 0.0, %v932
          %v934 = vpop.f32.mrf.mxu0
          %935 = vmatprep.mubr.bf16.mxu0 0
          %936 = vmatmul.mubr.bf16.gmra.mxu0 %v529
          %v937 = vpop.f32.mrf.mxu0
          %v938 = vadd.f32 0.0, %v937
          %v939 = vpop.f32.mrf.mxu0
          %v940 = vpop.f32.mrf.mxu0
          %v941 = vadd.f32 0.0, %v940
          %v942 = vpop.f32.mrf.mxu0
          %943 = vmatprep.mubr.bf16.mxu0 0
          %944 = vmatmul.mubr.bf16.gmra.mxu0 %v530
          %v945 = vpop.f32.mrf.mxu0
          %v946 = vadd.f32 0.0, %v945
          %v947 = vpop.f32.mrf.mxu0
          %v948 = vpop.f32.mrf.mxu0
          %v949 = vadd.f32 0.0, %v948
          %v950 = vpop.f32.mrf.mxu0
          %951 = vmatprep.mubr.bf16.mxu0 0
          %952 = vmatmul.mubr.bf16.gmra.mxu0 %v531
          %v953 = vpop.f32.mrf.mxu0
          %v954 = vadd.f32 0.0, %v953
          %v955 = vpop.f32.mrf.mxu0
          %v956 = vpop.f32.mrf.mxu0
          %v957 = vadd.f32 0.0, %v956
          %v958 = vpop.f32.mrf.mxu0
          %959 = vmatprep.mubr.bf16.mxu0 0
          %960 = vmatmul.mubr.bf16.gmra.mxu0 %v532
          %v961 = vpop.f32.mrf.mxu0
          %v962 = vadd.f32 0.0, %v961
          %v963 = vpop.f32.mrf.mxu0
          %v964 = vpop.f32.mrf.mxu0
          %v965 = vadd.f32 0.0, %v964
          %v966 = vpop.f32.mrf.mxu0
          %967 = vmatprep.mubr.bf16.mxu0 0
          %968 = vmatmul.mubr.bf16.gmra.mxu0 %v533
          %v969 = vpop.f32.mrf.mxu0
          %v970 = vadd.f32 0.0, %v969
          %v971 = vpop.f32.mrf.mxu0
          %v972 = vpop.f32.mrf.mxu0
          %v973 = vadd.f32 0.0, %v972
          %v974 = vpop.f32.mrf.mxu0
          %975 = vmatprep.mubr.bf16.mxu0 0
          %976 = vmatmul.mubr.bf16.gmra.mxu0 %v534
          %v977 = vpop.f32.mrf.mxu0
          %v978 = vadd.f32 0.0, %v977
          %v979 = vpop.f32.mrf.mxu0
          %v980 = vpop.f32.mrf.mxu0
          %v981 = vadd.f32 0.0, %v980
          %v982 = vpop.f32.mrf.mxu0
          %983 = vmatprep.mubr.bf16.mxu0 0
          %984 = vmatmul.mubr.bf16.gmra.mxu0 %v535
          %v985 = vpop.f32.mrf.mxu0
          %v986 = vadd.f32 0.0, %v985
          %v987 = vpop.f32.mrf.mxu0
          %v988 = vpop.f32.mrf.mxu0
          %v989 = vadd.f32 0.0, %v988
          %v990 = vpop.f32.mrf.mxu0
          %991 = vmatprep.mubr.bf16.mxu0 0
          %992 = vmatmul.mubr.bf16.gmra.mxu0 %v536
          %v993 = vpop.f32.mrf.mxu0
          %v994 = vadd.f32 0.0, %v993
          %v995 = vpop.f32.mrf.mxu0
          %v996 = vpop.f32.mrf.mxu0
          %v997 = vadd.f32 0.0, %v996
          %v998 = vpop.f32.mrf.mxu0
          %999 = vmatprep.mubr.bf16.mxu0 0
          %1000 = vmatmul.mubr.bf16.gmra.mxu0 %v537
          %v1001 = vpop.f32.mrf.mxu0
          %v1002 = vadd.f32 0.0, %v1001
          %v1003 = vpop.f32.mrf.mxu0
          %v1004 = vpop.f32.mrf.mxu0
          %v1005 = vadd.f32 0.0, %v1004
          %v1006 = vpop.f32.mrf.mxu0
          %1007 = vmatprep.mubr.bf16.mxu0 0
          %1008 = vmatmul.mubr.bf16.gmra.mxu0 %v538
          %v1009 = vpop.f32.mrf.mxu0
          %v1010 = vadd.f32 0.0, %v1009
          %v1011 = vpop.f32.mrf.mxu0
          %v1012 = vpop.f32.mrf.mxu0
          %v1013 = vadd.f32 0.0, %v1012
          %v1014 = vpop.f32.mrf.mxu0
          %1015 = vmatprep.mubr.bf16.mxu0 0
          %1016 = vmatmul.mubr.bf16.gmra.mxu0 %v539
          %v1017 = vpop.f32.mrf.mxu0
          %v1018 = vadd.f32 0.0, %v1017
          %v1019 = vpop.f32.mrf.mxu0
          %v1020 = vpop.f32.mrf.mxu0
          %v1021 = vadd.f32 0.0, %v1020
          %v1022 = vpop.f32.mrf.mxu0
          %1023 = vmatprep.mubr.bf16.mxu0 0
          %1024 = vmatmul.mubr.bf16.gmra.mxu0 %v540
          %v1025 = vpop.f32.mrf.mxu0
          %v1026 = vadd.f32 0.0, %v1025
          %v1027 = vpop.f32.mrf.mxu0
          %v1028 = vpop.f32.mrf.mxu0
          %v1029 = vadd.f32 0.0, %v1028
          %v1030 = vpop.f32.mrf.mxu0
          %1031 = vmatprep.mubr.bf16.mxu0 0
          %1032 = vmatmul.mubr.bf16.gmra.mxu0 %v541
          %v1033 = vpop.f32.mrf.mxu0
          %v1034 = vadd.f32 0.0, %v1033
          %v1035 = vpop.f32.mrf.mxu0
          %v1036 = vpop.f32.mrf.mxu0
          %v1037 = vadd.f32 0.0, %v1036
          %v1038 = vpop.f32.mrf.mxu0
          %1039 = vdwg.mxu0
          %v1040 = vadd.f32 %v721, 0.0
          %v1041 = vadd.f32 %v725, 0.0
          %v1042 = vadd.f32 %v731, 0.0
          %v1043 = vadd.f32 %v735, 0.0
          %v1044 = vadd.f32 %v741, 0.0
          %v1045 = vadd.f32 %v745, 0.0
          %v1046 = vadd.f32 %v751, 0.0
          %v1047 = vadd.f32 %v755, 0.0
          %v1048 = vadd.f32 %v761, 0.0
          %v1049 = vadd.f32 %v765, 0.0
          %v1050 = vadd.f32 %v771, 0.0
          %v1051 = vadd.f32 %v775, 0.0
          %v1052 = vadd.f32 %v781, 0.0
          %v1053 = vadd.f32 %v785, 0.0
          %v1054 = vadd.f32 %v791, 0.0
          %v1055 = vadd.f32 %v795, 0.0
          %v1056 = vadd.f32 %v801, 0.0
          %v1057 = vadd.f32 %v805, 0.0
          %v1058 = vadd.f32 %v811, 0.0
          %v1059 = vadd.f32 %v815, 0.0
          %v1060 = vadd.f32 %v821, 0.0
          %v1061 = vadd.f32 %v825, 0.0
          %v1062 = vadd.f32 %v831, 0.0
          %v1063 = vadd.f32 %v835, 0.0
          %v1064 = vadd.f32 %v841, 0.0
          %v1065 = vadd.f32 %v845, 0.0
          %v1066 = vadd.f32 %v851, 0.0
          %v1067 = vadd.f32 %v855, 0.0
          %v1068 = vadd.f32 %v861, 0.0
          %v1069 = vadd.f32 %v865, 0.0
          %v1070 = vadd.f32 %v871, 0.0
          %v1071 = vadd.f32 %v875, 0.0
          %v1072 = vadd.f32 %v360, %v723
          %v1073 = vadd.f32 %v361, %v727
          %v1074 = vadd.f32 %v362, %v733
          %v1075 = vadd.f32 %v363, %v737
          %v1076 = vadd.f32 %v364, %v743
          %v1077 = vadd.f32 %v365, %v747
          %v1078 = vadd.f32 %v366, %v753
          %v1079 = vadd.f32 %v367, %v757
          %v1080 = vadd.f32 %v368, %v763
          %v1081 = vadd.f32 %v369, %v767
          %v1082 = vadd.f32 %v370, %v773
          %v1083 = vadd.f32 %v371, %v777
          %v1084 = vadd.f32 %v372, %v783
          %v1085 = vadd.f32 %v373, %v787
          %v1086 = vadd.f32 %v374, %v793
          %v1087 = vadd.f32 %v375, %v797
          %v1088 = vadd.f32 %v376, %v803
          %v1089 = vadd.f32 %v377, %v807
          %v1090 = vadd.f32 %v378, %v813
          %v1091 = vadd.f32 %v379, %v817
          %v1092 = vadd.f32 %v380, %v823
          %v1093 = vadd.f32 %v381, %v827
          %v1094 = vadd.f32 %v382, %v833
          %v1095 = vadd.f32 %v383, %v837
          %v1096 = vadd.f32 %v384, %v843
          %v1097 = vadd.f32 %v385, %v847
          %v1098 = vadd.f32 %v386, %v853
          %v1099 = vadd.f32 %v387, %v857
          %v1100 = vadd.f32 %v388, %v863
          %v1101 = vadd.f32 %v389, %v867
          %v1102 = vadd.f32 %v390, %v873
          %v1103 = vadd.f32 %v391, %v877
          %v1104 = vadd.f32 %v914, 0.0
          %v1105 = vadd.f32 %v917, 0.0
          %v1106 = vadd.f32 %v922, 0.0
          %v1107 = vadd.f32 %v925, 0.0
          %v1108 = vadd.f32 %v930, 0.0
          %v1109 = vadd.f32 %v933, 0.0
          %v1110 = vadd.f32 %v938, 0.0
          %v1111 = vadd.f32 %v941, 0.0
          %v1112 = vadd.f32 %v946, 0.0
          %v1113 = vadd.f32 %v949, 0.0
          %v1114 = vadd.f32 %v954, 0.0
          %v1115 = vadd.f32 %v957, 0.0
          %v1116 = vadd.f32 %v962, 0.0
          %v1117 = vadd.f32 %v965, 0.0
          %v1118 = vadd.f32 %v970, 0.0
          %v1119 = vadd.f32 %v973, 0.0
          %v1120 = vadd.f32 %v978, 0.0
          %v1121 = vadd.f32 %v981, 0.0
          %v1122 = vadd.f32 %v986, 0.0
          %v1123 = vadd.f32 %v989, 0.0
          %v1124 = vadd.f32 %v994, 0.0
          %v1125 = vadd.f32 %v997, 0.0
          %v1126 = vadd.f32 %v1002, 0.0
          %v1127 = vadd.f32 %v1005, 0.0
          %v1128 = vadd.f32 %v1010, 0.0
          %v1129 = vadd.f32 %v1013, 0.0
          %v1130 = vadd.f32 %v1018, 0.0
          %v1131 = vadd.f32 %v1021, 0.0
          %v1132 = vadd.f32 %v1026, 0.0
          %v1133 = vadd.f32 %v1029, 0.0
          %v1134 = vadd.f32 %v1034, 0.0
          %v1135 = vadd.f32 %v1037, 0.0
          %s1136 = scalar_lea.vmem [#allocation2], 8
          %v1137 = vld [vmem:[%s1136] sm:$0xf]
          %v1138 = vld [vmem:[%s1136 + $0x4] sm:$0xf]
          %v1139 = vld [vmem:[%s1136 + $0x8] sm:$0xf]
          %v1140 = vld [vmem:[%s1136 + $0xc] sm:$0xf]
          %v1141 = vld [vmem:[%s1136 + $0x10] sm:$0xf]
          %v1142 = vld [vmem:[%s1136 + $0x14] sm:$0xf]
          %v1143 = vld [vmem:[%s1136 + $0x18] sm:$0xf]
          %v1144 = vld [vmem:[%s1136 + $0x1c] sm:$0xf]
          %v1145 = vld [vmem:[%s1136 + $0x20] sm:$0xf]
          %v1146 = vld [vmem:[%s1136 + $0x24] sm:$0xf]
          %v1147 = vld [vmem:[%s1136 + $0x28] sm:$0xf]
          %v1148 = vld [vmem:[%s1136 + $0x2c] sm:$0xf]
          %v1149 = vld [vmem:[%s1136 + $0x30] sm:$0xf]
          %v1150 = vld [vmem:[%s1136 + $0x34] sm:$0xf]
          %v1151 = vld [vmem:[%s1136 + $0x38] sm:$0xf]
          %v1152 = vld [vmem:[%s1136 + $0x3c] sm:$0xf]
          %v1153 = vld [vmem:[%s1136 + $0x40] sm:$0xf]
          %v1154 = vld [vmem:[%s1136 + $0x44] sm:$0xf]
          %v1155 = vld [vmem:[%s1136 + $0x48] sm:$0xf]
          %v1156 = vld [vmem:[%s1136 + $0x4c] sm:$0xf]
          %v1157 = vld [vmem:[%s1136 + $0x50] sm:$0xf]
          %v1158 = vld [vmem:[%s1136 + $0x54] sm:$0xf]
          %v1159 = vld [vmem:[%s1136 + $0x58] sm:$0xf]
          %v1160 = vld [vmem:[%s1136 + $0x5c] sm:$0xf]
          %v1161 = vld [vmem:[%s1136 + $0x60] sm:$0xf]
          %v1162 = vld [vmem:[%s1136 + $0x64] sm:$0xf]
          %v1163 = vld [vmem:[%s1136 + $0x68] sm:$0xf]
          %v1164 = vld [vmem:[%s1136 + $0x6c] sm:$0xf]
          %v1165 = vld [vmem:[%s1136 + $0x70] sm:$0xf]
          %v1166 = vld [vmem:[%s1136 + $0x74] sm:$0xf]
          %v1167 = vld [vmem:[%s1136 + $0x78] sm:$0xf]
          %v1168 = vld [vmem:[%s1136 + $0x7c] sm:$0xf]
          %s1169 = scalar_lea.vmem [#allocation7], 192
          %v1170 = vld [vmem:[%s1169] sm:$0xff]
          %v1171 = vld [vmem:[%s1169 + $0x8] sm:$0xf]
          %v1172 = vld [vmem:[%s1169 + $0xc] sm:$0xff]
          %v1173 = vld [vmem:[%s1169 + $0x14] sm:$0xf]
          %v1174 = vld [vmem:[%s1169 + $0x18] sm:$0xff]
          %v1175 = vld [vmem:[%s1169 + $0x20] sm:$0xf]
          %v1176 = vld [vmem:[%s1169 + $0x24] sm:$0xff]
          %v1177 = vld [vmem:[%s1169 + $0x2c] sm:$0xf]
          %v1178 = vld [vmem:[%s1169 + $0x30] sm:$0xff]
          %v1179 = vld [vmem:[%s1169 + $0x38] sm:$0xf]
          %v1180 = vld [vmem:[%s1169 + $0x3c] sm:$0xff]
          %v1181 = vld [vmem:[%s1169 + $0x44] sm:$0xf]
          %v1182 = vld [vmem:[%s1169 + $0x48] sm:$0xff]
          %v1183 = vld [vmem:[%s1169 + $0x50] sm:$0xf]
          %v1184 = vld [vmem:[%s1169 + $0x54] sm:$0xff]
          %v1185 = vld [vmem:[%s1169 + $0x5c] sm:$0xf]
          %v1186 = vld [vmem:[%s1169 + $0x60] sm:$0xff]
          %v1187 = vld [vmem:[%s1169 + $0x68] sm:$0xf]
          %v1188 = vld [vmem:[%s1169 + $0x6c] sm:$0xff]
          %v1189 = vld [vmem:[%s1169 + $0x74] sm:$0xf]
          %v1190 = vld [vmem:[%s1169 + $0x78] sm:$0xff]
          %v1191 = vld [vmem:[%s1169 + $0x80] sm:$0xf]
          %v1192 = vld [vmem:[%s1169 + $0x84] sm:$0xff]
          %v1193 = vld [vmem:[%s1169 + $0x8c] sm:$0xf]
          %v1194 = vld [vmem:[%s1169 + $0x90] sm:$0xff]
          %v1195 = vld [vmem:[%s1169 + $0x98] sm:$0xf]
          %v1196 = vld [vmem:[%s1169 + $0x9c] sm:$0xff]
          %v1197 = vld [vmem:[%s1169 + $0xa4] sm:$0xf]
          %v1198 = vld [vmem:[%s1169 + $0xa8] sm:$0xff]
          %v1199 = vld [vmem:[%s1169 + $0xb0] sm:$0xf]
          %v1200 = vld [vmem:[%s1169 + $0xb4] sm:$0xff]
          %v1201 = vld [vmem:[%s1169 + $0xbc] sm:$0xf]
          %v1234 = vunpack.c.l.b16 %v1137
          %v1235 = vunpack.c.l.b16 %v1138
          %v1236 = vunpack.c.l.b16 %v1139
          %v1237 = vunpack.c.l.b16 %v1140
          %v1238 = vunpack.c.l.b16 %v1141
          %v1239 = vunpack.c.l.b16 %v1142
          %v1240 = vunpack.c.l.b16 %v1143
          %v1241 = vunpack.c.l.b16 %v1144
          %v1242 = vunpack.c.l.b16 %v1145
          %v1243 = vunpack.c.l.b16 %v1146
          %v1244 = vunpack.c.l.b16 %v1147
          %v1245 = vunpack.c.l.b16 %v1148
          %v1246 = vunpack.c.l.b16 %v1149
          %v1247 = vunpack.c.l.b16 %v1150
          %v1248 = vunpack.c.l.b16 %v1151
          %v1249 = vunpack.c.l.b16 %v1152
          %v1250 = vunpack.c.l.b16 %v1153
          %v1251 = vunpack.c.l.b16 %v1154
          %v1252 = vunpack.c.l.b16 %v1155
          %v1253 = vunpack.c.l.b16 %v1156
          %v1254 = vunpack.c.l.b16 %v1157
          %v1255 = vunpack.c.l.b16 %v1158
          %v1256 = vunpack.c.l.b16 %v1159
          %v1257 = vunpack.c.l.b16 %v1160
          %v1258 = vunpack.c.l.b16 %v1161
          %v1259 = vunpack.c.l.b16 %v1162
          %v1260 = vunpack.c.l.b16 %v1163
          %v1261 = vunpack.c.l.b16 %v1164
          %v1262 = vunpack.c.l.b16 %v1165
          %v1263 = vunpack.c.l.b16 %v1166
          %v1264 = vunpack.c.l.b16 %v1167
          %v1265 = vunpack.c.l.b16 %v1168
          %v1266 = vpack.c.b16 %v1235, %v1234
          %v1267 = vpack.c.b16 %v1237, %v1236
          %v1268 = vpack.c.b16 %v1239, %v1238
          %v1269 = vpack.c.b16 %v1241, %v1240
          %v1270 = vpack.c.b16 %v1243, %v1242
          %v1271 = vpack.c.b16 %v1245, %v1244
          %v1272 = vpack.c.b16 %v1247, %v1246
          %v1273 = vpack.c.b16 %v1249, %v1248
          %v1274 = vpack.c.b16 %v1251, %v1250
          %v1275 = vpack.c.b16 %v1253, %v1252
          %v1276 = vpack.c.b16 %v1255, %v1254
          %v1277 = vpack.c.b16 %v1257, %v1256
          %v1278 = vpack.c.b16 %v1259, %v1258
          %v1279 = vpack.c.b16 %v1261, %v1260
          %v1280 = vpack.c.b16 %v1263, %v1262
          %v1281 = vpack.c.b16 %v1265, %v1264
          %v1330 = vunpack.c.l.b16 %v1170
          %v1331 = vunpack.c.h.b16 %v1170
          %v1332 = vunpack.c.l.b16 %v1171
          %v1333 = vunpack.c.l.b16 %v1172
          %v1334 = vunpack.c.h.b16 %v1172
          %v1335 = vunpack.c.l.b16 %v1173
          %v1336 = vunpack.c.l.b16 %v1174
          %v1337 = vunpack.c.h.b16 %v1174
          %v1338 = vunpack.c.l.b16 %v1175
          %v1339 = vunpack.c.l.b16 %v1176
          %v1340 = vunpack.c.h.b16 %v1176
          %v1341 = vunpack.c.l.b16 %v1177
          %v1342 = vunpack.c.l.b16 %v1178
          %v1343 = vunpack.c.h.b16 %v1178
          %v1344 = vunpack.c.l.b16 %v1179
          %v1345 = vunpack.c.l.b16 %v1180
          %v1346 = vunpack.c.h.b16 %v1180
          %v1347 = vunpack.c.l.b16 %v1181
          %v1348 = vunpack.c.l.b16 %v1182
          %v1349 = vunpack.c.h.b16 %v1182
          %v1350 = vunpack.c.l.b16 %v1183
          %v1351 = vunpack.c.l.b16 %v1184
          %v1352 = vunpack.c.h.b16 %v1184
          %v1353 = vunpack.c.l.b16 %v1185
          %v1354 = vunpack.c.l.b16 %v1186
          %v1355 = vunpack.c.h.b16 %v1186
          %v1356 = vunpack.c.l.b16 %v1187
          %v1357 = vunpack.c.l.b16 %v1188
          %v1358 = vunpack.c.h.b16 %v1188
          %v1359 = vunpack.c.l.b16 %v1189
          %v1360 = vunpack.c.l.b16 %v1190
          %v1361 = vunpack.c.h.b16 %v1190
          %v1362 = vunpack.c.l.b16 %v1191
          %v1363 = vunpack.c.l.b16 %v1192
          %v1364 = vunpack.c.h.b16 %v1192
          %v1365 = vunpack.c.l.b16 %v1193
          %v1366 = vunpack.c.l.b16 %v1194
          %v1367 = vunpack.c.h.b16 %v1194
          %v1368 = vunpack.c.l.b16 %v1195
          %v1369 = vunpack.c.l.b16 %v1196
          %v1370 = vunpack.c.h.b16 %v1196
          %v1371 = vunpack.c.l.b16 %v1197
          %v1372 = vunpack.c.l.b16 %v1198
          %v1373 = vunpack.c.h.b16 %v1198
          %v1374 = vunpack.c.l.b16 %v1199
          %v1375 = vunpack.c.l.b16 %v1200
          %v1376 = vunpack.c.h.b16 %v1200
          %v1377 = vunpack.c.l.b16 %v1201
          %v1378 = vpack.c.b16 %v1333, %v1330
          %v1379 = vpack.c.b16 %v1334, %v1331
          %v1380 = vpack.c.b16 %v1335, %v1332
          %v1381 = vpack.c.b16 %v1339, %v1336
          %v1382 = vpack.c.b16 %v1340, %v1337
          %v1383 = vpack.c.b16 %v1341, %v1338
          %v1384 = vpack.c.b16 %v1345, %v1342
          %v1385 = vpack.c.b16 %v1346, %v1343
          %v1386 = vpack.c.b16 %v1347, %v1344
          %v1387 = vpack.c.b16 %v1351, %v1348
          %v1388 = vpack.c.b16 %v1352, %v1349
          %v1389 = vpack.c.b16 %v1353, %v1350
          %v1390 = vpack.c.b16 %v1357, %v1354
          %v1391 = vpack.c.b16 %v1358, %v1355
          %v1392 = vpack.c.b16 %v1359, %v1356
          %v1393 = vpack.c.b16 %v1363, %v1360
          %v1394 = vpack.c.b16 %v1364, %v1361
          %v1395 = vpack.c.b16 %v1365, %v1362
          %v1396 = vpack.c.b16 %v1369, %v1366
          %v1397 = vpack.c.b16 %v1370, %v1367
          %v1398 = vpack.c.b16 %v1371, %v1368
          %v1399 = vpack.c.b16 %v1375, %v1372
          %v1400 = vpack.c.b16 %v1376, %v1373
          %v1401 = vpack.c.b16 %v1377, %v1374
          %1426 = vmatprep.subr.bf16.mxu0 %v1400
          %1427 = vmatpush1.bf16.msra.mxu0 %v1399
          %1428 = vmatprep.subr.bf16.mxu0 %v1397
          %1429 = vmatpush1.bf16.msra.mxu0 %v1396
          %1430 = vmatprep.subr.bf16.mxu0 %v1394
          %1431 = vmatpush1.bf16.msra.mxu0 %v1393
          %1432 = vmatprep.subr.bf16.mxu0 %v1391
          %1433 = vmatpush1.bf16.msra.mxu0 %v1390
          %1434 = vmatprep.subr.bf16.mxu0 %v1388
          %1435 = vmatpush1.bf16.msra.mxu0 %v1387
          %1436 = vmatprep.subr.bf16.mxu0 %v1385
          %1437 = vmatpush1.bf16.msra.mxu0 %v1384
          %1438 = vmatprep.subr.bf16.mxu0 %v1382
          %1439 = vmatpush1.bf16.msra.mxu0 %v1381
          %1440 = vmatprep.subr.bf16.mxu0 %v1379
          %1441 = vmatpush1.bf16.msra.mxu0 %v1378
          %1442 = vmatprep.subr.bf16.mxu0 0
          %1443 = vmatpush2.bf16.msra.mxu0 0
          %1444 = vmatprep.subr.bf16.mxu0 0
          %1445 = vmatpush2.bf16.msra.mxu0 0
          %1446 = vmatprep.subr.bf16.mxu0 0
          %1447 = vmatpush2.bf16.msra.mxu0 0
          %1448 = vmatprep.subr.bf16.mxu0 0
          %1449 = vmatpush2.bf16.msra.mxu0 0
          %1450 = vmatprep.subr.bf16.mxu0 0
          %1451 = vmatpush2.bf16.msra.mxu0 0
          %1452 = vmatprep.subr.bf16.mxu0 0
          %1453 = vmatpush2.bf16.msra.mxu0 0
          %1454 = vmatprep.subr.bf16.mxu0 0
          %1455 = vmatpush2.bf16.msra.mxu0 0
          %1456 = vmatprep.subr.bf16.mxu0 0
          %1457 = vmatpush2.bf16.msra.mxu0 0
          %1458 = vmatprep.mubr.bf16.mxu0 0
          %1459 = vmatmul.mubr.bf16.gmra.mxu0 %v1266
          %v1460 = vpop.f32.mrf.mxu0
          %v1461 = vadd.f32 0.0, %v1460
          %v1462 = vpop.f32.mrf.mxu0
          %v1463 = vadd.f32 0.0, %v1462
          %v1464 = vpop.f32.mrf.mxu0
          %v1465 = vadd.f32 0.0, %v1464
          %v1466 = vpop.f32.mrf.mxu0
          %v1467 = vadd.f32 0.0, %v1466
          %1468 = vmatprep.mubr.bf16.mxu0 0
          %1469 = vmatmul.mubr.bf16.gmra.mxu0 %v1267
          %v1470 = vpop.f32.mrf.mxu0
          %v1471 = vadd.f32 0.0, %v1470
          %v1472 = vpop.f32.mrf.mxu0
          %v1473 = vadd.f32 0.0, %v1472
          %v1474 = vpop.f32.mrf.mxu0
          %v1475 = vadd.f32 0.0, %v1474
          %v1476 = vpop.f32.mrf.mxu0
          %v1477 = vadd.f32 0.0, %v1476
          %1478 = vmatprep.mubr.bf16.mxu0 0
          %1479 = vmatmul.mubr.bf16.gmra.mxu0 %v1268
          %v1480 = vpop.f32.mrf.mxu0
          %v1481 = vadd.f32 0.0, %v1480
          %v1482 = vpop.f32.mrf.mxu0
          %v1483 = vadd.f32 0.0, %v1482
          %v1484 = vpop.f32.mrf.mxu0
          %v1485 = vadd.f32 0.0, %v1484
          %v1486 = vpop.f32.mrf.mxu0
          %v1487 = vadd.f32 0.0, %v1486
          %1488 = vmatprep.mubr.bf16.mxu0 0
          %1489 = vmatmul.mubr.bf16.gmra.mxu0 %v1269
          %v1490 = vpop.f32.mrf.mxu0
          %v1491 = vadd.f32 0.0, %v1490
          %v1492 = vpop.f32.mrf.mxu0
          %v1493 = vadd.f32 0.0, %v1492
          %v1494 = vpop.f32.mrf.mxu0
          %v1495 = vadd.f32 0.0, %v1494
          %v1496 = vpop.f32.mrf.mxu0
          %v1497 = vadd.f32 0.0, %v1496
          %1498 = vmatprep.mubr.bf16.mxu0 0
          %1499 = vmatmul.mubr.bf16.gmra.mxu0 %v1270
          %v1500 = vpop.f32.mrf.mxu0
          %v1501 = vadd.f32 0.0, %v1500
          %v1502 = vpop.f32.mrf.mxu0
          %v1503 = vadd.f32 0.0, %v1502
          %v1504 = vpop.f32.mrf.mxu0
          %v1505 = vadd.f32 0.0, %v1504
          %v1506 = vpop.f32.mrf.mxu0
          %v1507 = vadd.f32 0.0, %v1506
          %1508 = vmatprep.mubr.bf16.mxu0 0
          %1509 = vmatmul.mubr.bf16.gmra.mxu0 %v1271
          %v1510 = vpop.f32.mrf.mxu0
          %v1511 = vadd.f32 0.0, %v1510
          %v1512 = vpop.f32.mrf.mxu0
          %v1513 = vadd.f32 0.0, %v1512
          %v1514 = vpop.f32.mrf.mxu0
          %v1515 = vadd.f32 0.0, %v1514
          %v1516 = vpop.f32.mrf.mxu0
          %v1517 = vadd.f32 0.0, %v1516
          %1518 = vmatprep.mubr.bf16.mxu0 0
          %1519 = vmatmul.mubr.bf16.gmra.mxu0 %v1272
          %v1520 = vpop.f32.mrf.mxu0
          %v1521 = vadd.f32 0.0, %v1520
          %v1522 = vpop.f32.mrf.mxu0
          %v1523 = vadd.f32 0.0, %v1522
          %v1524 = vpop.f32.mrf.mxu0
          %v1525 = vadd.f32 0.0, %v1524
          %v1526 = vpop.f32.mrf.mxu0
          %v1527 = vadd.f32 0.0, %v1526
          %1528 = vmatprep.mubr.bf16.mxu0 0
          %1529 = vmatmul.mubr.bf16.gmra.mxu0 %v1273
          %v1530 = vpop.f32.mrf.mxu0
          %v1531 = vadd.f32 0.0, %v1530
          %v1532 = vpop.f32.mrf.mxu0
          %v1533 = vadd.f32 0.0, %v1532
          %v1534 = vpop.f32.mrf.mxu0
          %v1535 = vadd.f32 0.0, %v1534
          %v1536 = vpop.f32.mrf.mxu0
          %v1537 = vadd.f32 0.0, %v1536
          %1538 = vmatprep.mubr.bf16.mxu0 0
          %1539 = vmatmul.mubr.bf16.gmra.mxu0 %v1274
          %v1540 = vpop.f32.mrf.mxu0
          %v1541 = vadd.f32 0.0, %v1540
          %v1542 = vpop.f32.mrf.mxu0
          %v1543 = vadd.f32 0.0, %v1542
          %v1544 = vpop.f32.mrf.mxu0
          %v1545 = vadd.f32 0.0, %v1544
          %v1546 = vpop.f32.mrf.mxu0
          %v1547 = vadd.f32 0.0, %v1546
          %1548 = vmatprep.mubr.bf16.mxu0 0
          %1549 = vmatmul.mubr.bf16.gmra.mxu0 %v1275
          %v1550 = vpop.f32.mrf.mxu0
          %v1551 = vadd.f32 0.0, %v1550
          %v1552 = vpop.f32.mrf.mxu0
          %v1553 = vadd.f32 0.0, %v1552
          %v1554 = vpop.f32.mrf.mxu0
          %v1555 = vadd.f32 0.0, %v1554
          %v1556 = vpop.f32.mrf.mxu0
          %v1557 = vadd.f32 0.0, %v1556
          %1558 = vmatprep.mubr.bf16.mxu0 0
          %1559 = vmatmul.mubr.bf16.gmra.mxu0 %v1276
          %v1560 = vpop.f32.mrf.mxu0
          %v1561 = vadd.f32 0.0, %v1560
          %v1562 = vpop.f32.mrf.mxu0
          %v1563 = vadd.f32 0.0, %v1562
          %v1564 = vpop.f32.mrf.mxu0
          %v1565 = vadd.f32 0.0, %v1564
          %v1566 = vpop.f32.mrf.mxu0
          %v1567 = vadd.f32 0.0, %v1566
          %1568 = vmatprep.mubr.bf16.mxu0 0
          %1569 = vmatmul.mubr.bf16.gmra.mxu0 %v1277
          %v1570 = vpop.f32.mrf.mxu0
          %v1571 = vadd.f32 0.0, %v1570
          %v1572 = vpop.f32.mrf.mxu0
          %v1573 = vadd.f32 0.0, %v1572
          %v1574 = vpop.f32.mrf.mxu0
          %v1575 = vadd.f32 0.0, %v1574
          %v1576 = vpop.f32.mrf.mxu0
          %v1577 = vadd.f32 0.0, %v1576
          %1578 = vmatprep.mubr.bf16.mxu0 0
          %1579 = vmatmul.mubr.bf16.gmra.mxu0 %v1278
          %v1580 = vpop.f32.mrf.mxu0
          %v1581 = vadd.f32 0.0, %v1580
          %v1582 = vpop.f32.mrf.mxu0
          %v1583 = vadd.f32 0.0, %v1582
          %v1584 = vpop.f32.mrf.mxu0
          %v1585 = vadd.f32 0.0, %v1584
          %v1586 = vpop.f32.mrf.mxu0
          %v1587 = vadd.f32 0.0, %v1586
          %1588 = vmatprep.mubr.bf16.mxu0 0
          %1589 = vmatmul.mubr.bf16.gmra.mxu0 %v1279
          %v1590 = vpop.f32.mrf.mxu0
          %v1591 = vadd.f32 0.0, %v1590
          %v1592 = vpop.f32.mrf.mxu0
          %v1593 = vadd.f32 0.0, %v1592
          %v1594 = vpop.f32.mrf.mxu0
          %v1595 = vadd.f32 0.0, %v1594
          %v1596 = vpop.f32.mrf.mxu0
          %v1597 = vadd.f32 0.0, %v1596
          %1598 = vmatprep.mubr.bf16.mxu0 0
          %1599 = vmatmul.mubr.bf16.gmra.mxu0 %v1280
          %v1600 = vpop.f32.mrf.mxu0
          %v1601 = vadd.f32 0.0, %v1600
          %v1602 = vpop.f32.mrf.mxu0
          %v1603 = vadd.f32 0.0, %v1602
          %v1604 = vpop.f32.mrf.mxu0
          %v1605 = vadd.f32 0.0, %v1604
          %v1606 = vpop.f32.mrf.mxu0
          %v1607 = vadd.f32 0.0, %v1606
          %1608 = vmatprep.mubr.bf16.mxu0 0
          %1609 = vmatmul.mubr.bf16.gmra.mxu0 %v1281
          %v1610 = vpop.f32.mrf.mxu0
          %v1611 = vadd.f32 0.0, %v1610
          %v1612 = vpop.f32.mrf.mxu0
          %v1613 = vadd.f32 0.0, %v1612
          %v1614 = vpop.f32.mrf.mxu0
          %v1615 = vadd.f32 0.0, %v1614
          %v1616 = vpop.f32.mrf.mxu0
          %v1617 = vadd.f32 0.0, %v1616
          %1618 = vdwg.mxu0
          %1619 = vmatprep.subr.bf16.mxu0 0
          %1620 = vmatpush1.bf16.msra.mxu0 %v1401
          %1621 = vmatprep.subr.bf16.mxu0 0
          %1622 = vmatpush1.bf16.msra.mxu0 %v1398
          %1623 = vmatprep.subr.bf16.mxu0 0
          %1624 = vmatpush1.bf16.msra.mxu0 %v1395
          %1625 = vmatprep.subr.bf16.mxu0 0
          %1626 = vmatpush1.bf16.msra.mxu0 %v1392
          %1627 = vmatprep.subr.bf16.mxu0 0
          %1628 = vmatpush1.bf16.msra.mxu0 %v1389
          %1629 = vmatprep.subr.bf16.mxu0 0
          %1630 = vmatpush1.bf16.msra.mxu0 %v1386
          %1631 = vmatprep.subr.bf16.mxu0 0
          %1632 = vmatpush1.bf16.msra.mxu0 %v1383
          %1633 = vmatprep.subr.bf16.mxu0 0
          %1634 = vmatpush1.bf16.msra.mxu0 %v1380
          %1635 = vmatprep.subr.bf16.mxu0 0
          %1636 = vmatpush2.bf16.msra.mxu0 0
          %1637 = vmatprep.subr.bf16.mxu0 0
          %1638 = vmatpush2.bf16.msra.mxu0 0
          %1639 = vmatprep.subr.bf16.mxu0 0
          %1640 = vmatpush2.bf16.msra.mxu0 0
          %1641 = vmatprep.subr.bf16.mxu0 0
          %1642 = vmatpush2.bf16.msra.mxu0 0
          %1643 = vmatprep.subr.bf16.mxu0 0
          %1644 = vmatpush2.bf16.msra.mxu0 0
          %1645 = vmatprep.subr.bf16.mxu0 0
          %1646 = vmatpush2.bf16.msra.mxu0 0
          %1647 = vmatprep.subr.bf16.mxu0 0
          %1648 = vmatpush2.bf16.msra.mxu0 0
          %1649 = vmatprep.subr.bf16.mxu0 0
          %1650 = vmatpush2.bf16.msra.mxu0 0
          %1651 = vmatprep.mubr.bf16.mxu0 0
          %1652 = vmatmul.mubr.bf16.gmra.mxu0 %v1266
          %v1653 = vpop.f32.mrf.mxu0
          %v1654 = vadd.f32 0.0, %v1653
          %v1655 = vpop.f32.mrf.mxu0
          %v1656 = vpop.f32.mrf.mxu0
          %v1657 = vadd.f32 0.0, %v1656
          %v1658 = vpop.f32.mrf.mxu0
          %1659 = vmatprep.mubr.bf16.mxu0 0
          %1660 = vmatmul.mubr.bf16.gmra.mxu0 %v1267
          %v1661 = vpop.f32.mrf.mxu0
          %v1662 = vadd.f32 0.0, %v1661
          %v1663 = vpop.f32.mrf.mxu0
          %v1664 = vpop.f32.mrf.mxu0
          %v1665 = vadd.f32 0.0, %v1664
          %v1666 = vpop.f32.mrf.mxu0
          %1667 = vmatprep.mubr.bf16.mxu0 0
          %1668 = vmatmul.mubr.bf16.gmra.mxu0 %v1268
          %v1669 = vpop.f32.mrf.mxu0
          %v1670 = vadd.f32 0.0, %v1669
          %v1671 = vpop.f32.mrf.mxu0
          %v1672 = vpop.f32.mrf.mxu0
          %v1673 = vadd.f32 0.0, %v1672
          %v1674 = vpop.f32.mrf.mxu0
          %1675 = vmatprep.mubr.bf16.mxu0 0
          %1676 = vmatmul.mubr.bf16.gmra.mxu0 %v1269
          %v1677 = vpop.f32.mrf.mxu0
          %v1678 = vadd.f32 0.0, %v1677
          %v1679 = vpop.f32.mrf.mxu0
          %v1680 = vpop.f32.mrf.mxu0
          %v1681 = vadd.f32 0.0, %v1680
          %v1682 = vpop.f32.mrf.mxu0
          %1683 = vmatprep.mubr.bf16.mxu0 0
          %1684 = vmatmul.mubr.bf16.gmra.mxu0 %v1270
          %v1685 = vpop.f32.mrf.mxu0
          %v1686 = vadd.f32 0.0, %v1685
          %v1687 = vpop.f32.mrf.mxu0
          %v1688 = vpop.f32.mrf.mxu0
          %v1689 = vadd.f32 0.0, %v1688
          %v1690 = vpop.f32.mrf.mxu0
          %1691 = vmatprep.mubr.bf16.mxu0 0
          %1692 = vmatmul.mubr.bf16.gmra.mxu0 %v1271
          %v1693 = vpop.f32.mrf.mxu0
          %v1694 = vadd.f32 0.0, %v1693
          %v1695 = vpop.f32.mrf.mxu0
          %v1696 = vpop.f32.mrf.mxu0
          %v1697 = vadd.f32 0.0, %v1696
          %v1698 = vpop.f32.mrf.mxu0
          %1699 = vmatprep.mubr.bf16.mxu0 0
          %1700 = vmatmul.mubr.bf16.gmra.mxu0 %v1272
          %v1701 = vpop.f32.mrf.mxu0
          %v1702 = vadd.f32 0.0, %v1701
          %v1703 = vpop.f32.mrf.mxu0
          %v1704 = vpop.f32.mrf.mxu0
          %v1705 = vadd.f32 0.0, %v1704
          %v1706 = vpop.f32.mrf.mxu0
          %1707 = vmatprep.mubr.bf16.mxu0 0
          %1708 = vmatmul.mubr.bf16.gmra.mxu0 %v1273
          %v1709 = vpop.f32.mrf.mxu0
          %v1710 = vadd.f32 0.0, %v1709
          %v1711 = vpop.f32.mrf.mxu0
          %v1712 = vpop.f32.mrf.mxu0
          %v1713 = vadd.f32 0.0, %v1712
          %v1714 = vpop.f32.mrf.mxu0
          %1715 = vmatprep.mubr.bf16.mxu0 0
          %1716 = vmatmul.mubr.bf16.gmra.mxu0 %v1274
          %v1717 = vpop.f32.mrf.mxu0
          %v1718 = vadd.f32 0.0, %v1717
          %v1719 = vpop.f32.mrf.mxu0
          %v1720 = vpop.f32.mrf.mxu0
          %v1721 = vadd.f32 0.0, %v1720
          %v1722 = vpop.f32.mrf.mxu0
          %1723 = vmatprep.mubr.bf16.mxu0 0
          %1724 = vmatmul.mubr.bf16.gmra.mxu0 %v1275
          %v1725 = vpop.f32.mrf.mxu0
          %v1726 = vadd.f32 0.0, %v1725
          %v1727 = vpop.f32.mrf.mxu0
          %v1728 = vpop.f32.mrf.mxu0
          %v1729 = vadd.f32 0.0, %v1728
          %v1730 = vpop.f32.mrf.mxu0
          %1731 = vmatprep.mubr.bf16.mxu0 0
          %1732 = vmatmul.mubr.bf16.gmra.mxu0 %v1276
          %v1733 = vpop.f32.mrf.mxu0
          %v1734 = vadd.f32 0.0, %v1733
          %v1735 = vpop.f32.mrf.mxu0
          %v1736 = vpop.f32.mrf.mxu0
          %v1737 = vadd.f32 0.0, %v1736
          %v1738 = vpop.f32.mrf.mxu0
          %1739 = vmatprep.mubr.bf16.mxu0 0
          %1740 = vmatmul.mubr.bf16.gmra.mxu0 %v1277
          %v1741 = vpop.f32.mrf.mxu0
          %v1742 = vadd.f32 0.0, %v1741
          %v1743 = vpop.f32.mrf.mxu0
          %v1744 = vpop.f32.mrf.mxu0
          %v1745 = vadd.f32 0.0, %v1744
          %v1746 = vpop.f32.mrf.mxu0
          %1747 = vmatprep.mubr.bf16.mxu0 0
          %1748 = vmatmul.mubr.bf16.gmra.mxu0 %v1278
          %v1749 = vpop.f32.mrf.mxu0
          %v1750 = vadd.f32 0.0, %v1749
          %v1751 = vpop.f32.mrf.mxu0
          %v1752 = vpop.f32.mrf.mxu0
          %v1753 = vadd.f32 0.0, %v1752
          %v1754 = vpop.f32.mrf.mxu0
          %1755 = vmatprep.mubr.bf16.mxu0 0
          %1756 = vmatmul.mubr.bf16.gmra.mxu0 %v1279
          %v1757 = vpop.f32.mrf.mxu0
          %v1758 = vadd.f32 0.0, %v1757
          %v1759 = vpop.f32.mrf.mxu0
          %v1760 = vpop.f32.mrf.mxu0
          %v1761 = vadd.f32 0.0, %v1760
          %v1762 = vpop.f32.mrf.mxu0
          %1763 = vmatprep.mubr.bf16.mxu0 0
          %1764 = vmatmul.mubr.bf16.gmra.mxu0 %v1280
          %v1765 = vpop.f32.mrf.mxu0
          %v1766 = vadd.f32 0.0, %v1765
          %v1767 = vpop.f32.mrf.mxu0
          %v1768 = vpop.f32.mrf.mxu0
          %v1769 = vadd.f32 0.0, %v1768
          %v1770 = vpop.f32.mrf.mxu0
          %1771 = vmatprep.mubr.bf16.mxu0 0
          %1772 = vmatmul.mubr.bf16.gmra.mxu0 %v1281
          %v1773 = vpop.f32.mrf.mxu0
          %v1774 = vadd.f32 0.0, %v1773
          %v1775 = vpop.f32.mrf.mxu0
          %v1776 = vpop.f32.mrf.mxu0
          %v1777 = vadd.f32 0.0, %v1776
          %v1778 = vpop.f32.mrf.mxu0
          %1779 = vdwg.mxu0
          %v1780 = vadd.f32 %v1040, %v1461
          %v1781 = vadd.f32 %v1041, %v1465
          %v1782 = vadd.f32 %v1042, %v1471
          %v1783 = vadd.f32 %v1043, %v1475
          %v1784 = vadd.f32 %v1044, %v1481
          %v1785 = vadd.f32 %v1045, %v1485
          %v1786 = vadd.f32 %v1046, %v1491
          %v1787 = vadd.f32 %v1047, %v1495
          %v1788 = vadd.f32 %v1048, %v1501
          %v1789 = vadd.f32 %v1049, %v1505
          %v1790 = vadd.f32 %v1050, %v1511
          %v1791 = vadd.f32 %v1051, %v1515
          %v1792 = vadd.f32 %v1052, %v1521
          %v1793 = vadd.f32 %v1053, %v1525
          %v1794 = vadd.f32 %v1054, %v1531
          %v1795 = vadd.f32 %v1055, %v1535
          %v1796 = vadd.f32 %v1056, %v1541
          %v1797 = vadd.f32 %v1057, %v1545
          %v1798 = vadd.f32 %v1058, %v1551
          %v1799 = vadd.f32 %v1059, %v1555
          %v1800 = vadd.f32 %v1060, %v1561
          %v1801 = vadd.f32 %v1061, %v1565
          %v1802 = vadd.f32 %v1062, %v1571
          %v1803 = vadd.f32 %v1063, %v1575
          %v1804 = vadd.f32 %v1064, %v1581
          %v1805 = vadd.f32 %v1065, %v1585
          %v1806 = vadd.f32 %v1066, %v1591
          %v1807 = vadd.f32 %v1067, %v1595
          %v1808 = vadd.f32 %v1068, %v1601
          %v1809 = vadd.f32 %v1069, %v1605
          %v1810 = vadd.f32 %v1070, %v1611
          %v1811 = vadd.f32 %v1071, %v1615
          %v1812 = vadd.f32 %v1072, %v1463
          %v1813 = vadd.f32 %v1073, %v1467
          %v1814 = vadd.f32 %v1074, %v1473
          %v1815 = vadd.f32 %v1075, %v1477
          %v1816 = vadd.f32 %v1076, %v1483
          %v1817 = vadd.f32 %v1077, %v1487
          %v1818 = vadd.f32 %v1078, %v1493
          %v1819 = vadd.f32 %v1079, %v1497
          %v1820 = vadd.f32 %v1080, %v1503
          %v1821 = vadd.f32 %v1081, %v1507
          %v1822 = vadd.f32 %v1082, %v1513
          %v1823 = vadd.f32 %v1083, %v1517
          %v1824 = vadd.f32 %v1084, %v1523
          %v1825 = vadd.f32 %v1085, %v1527
          %v1826 = vadd.f32 %v1086, %v1533
          %v1827 = vadd.f32 %v1087, %v1537
          %v1828 = vadd.f32 %v1088, %v1543
          %v1829 = vadd.f32 %v1089, %v1547
          %v1830 = vadd.f32 %v1090, %v1553
          %v1831 = vadd.f32 %v1091, %v1557
          %v1832 = vadd.f32 %v1092, %v1563
          %v1833 = vadd.f32 %v1093, %v1567
          %v1834 = vadd.f32 %v1094, %v1573
          %v1835 = vadd.f32 %v1095, %v1577
          %v1836 = vadd.f32 %v1096, %v1583
          %v1837 = vadd.f32 %v1097, %v1587
          %v1838 = vadd.f32 %v1098, %v1593
          %v1839 = vadd.f32 %v1099, %v1597
          %v1840 = vadd.f32 %v1100, %v1603
          %v1841 = vadd.f32 %v1101, %v1607
          %v1842 = vadd.f32 %v1102, %v1613
          %v1843 = vadd.f32 %v1103, %v1617
          %v1844 = vadd.f32 %v1104, %v1654
          %v1845 = vadd.f32 %v1105, %v1657
          %v1846 = vadd.f32 %v1106, %v1662
          %v1847 = vadd.f32 %v1107, %v1665
          %v1848 = vadd.f32 %v1108, %v1670
          %v1849 = vadd.f32 %v1109, %v1673
          %v1850 = vadd.f32 %v1110, %v1678
          %v1851 = vadd.f32 %v1111, %v1681
          %v1852 = vadd.f32 %v1112, %v1686
          %v1853 = vadd.f32 %v1113, %v1689
          %v1854 = vadd.f32 %v1114, %v1694
          %v1855 = vadd.f32 %v1115, %v1697
          %v1856 = vadd.f32 %v1116, %v1702
          %v1857 = vadd.f32 %v1117, %v1705
          %v1858 = vadd.f32 %v1118, %v1710
          %v1859 = vadd.f32 %v1119, %v1713
          %v1860 = vadd.f32 %v1120, %v1718
          %v1861 = vadd.f32 %v1121, %v1721
          %v1862 = vadd.f32 %v1122, %v1726
          %v1863 = vadd.f32 %v1123, %v1729
          %v1864 = vadd.f32 %v1124, %v1734
          %v1865 = vadd.f32 %v1125, %v1737
          %v1866 = vadd.f32 %v1126, %v1742
          %v1867 = vadd.f32 %v1127, %v1745
          %v1868 = vadd.f32 %v1128, %v1750
          %v1869 = vadd.f32 %v1129, %v1753
          %v1870 = vadd.f32 %v1130, %v1758
          %v1871 = vadd.f32 %v1131, %v1761
          %v1872 = vadd.f32 %v1132, %v1766
          %v1873 = vadd.f32 %v1133, %v1769
          %v1874 = vadd.f32 %v1134, %v1774
          %v1875 = vadd.f32 %v1135, %v1777
          %s1876 = scalar_lea.vmem [#allocation2], 16
          %v1877 = vld [vmem:[%s1876] sm:$0xf]
          %v1878 = vld [vmem:[%s1876 + $0x4] sm:$0xf]
          %v1879 = vld [vmem:[%s1876 + $0x8] sm:$0xf]
          %v1880 = vld [vmem:[%s1876 + $0xc] sm:$0xf]
          %v1881 = vld [vmem:[%s1876 + $0x10] sm:$0xf]
          %v1882 = vld [vmem:[%s1876 + $0x14] sm:$0xf]
          %v1883 = vld [vmem:[%s1876 + $0x18] sm:$0xf]
          %v1884 = vld [vmem:[%s1876 + $0x1c] sm:$0xf]
          %v1885 = vld [vmem:[%s1876 + $0x20] sm:$0xf]
          %v1886 = vld [vmem:[%s1876 + $0x24] sm:$0xf]
          %v1887 = vld [vmem:[%s1876 + $0x28] sm:$0xf]
          %v1888 = vld [vmem:[%s1876 + $0x2c] sm:$0xf]
          %v1889 = vld [vmem:[%s1876 + $0x30] sm:$0xf]
          %v1890 = vld [vmem:[%s1876 + $0x34] sm:$0xf]
          %v1891 = vld [vmem:[%s1876 + $0x38] sm:$0xf]
          %v1892 = vld [vmem:[%s1876 + $0x3c] sm:$0xf]
          %v1893 = vld [vmem:[%s1876 + $0x40] sm:$0xf]
          %v1894 = vld [vmem:[%s1876 + $0x44] sm:$0xf]
          %v1895 = vld [vmem:[%s1876 + $0x48] sm:$0xf]
          %v1896 = vld [vmem:[%s1876 + $0x4c] sm:$0xf]
          %v1897 = vld [vmem:[%s1876 + $0x50] sm:$0xf]
          %v1898 = vld [vmem:[%s1876 + $0x54] sm:$0xf]
          %v1899 = vld [vmem:[%s1876 + $0x58] sm:$0xf]
          %v1900 = vld [vmem:[%s1876 + $0x5c] sm:$0xf]
          %v1901 = vld [vmem:[%s1876 + $0x60] sm:$0xf]
          %v1902 = vld [vmem:[%s1876 + $0x64] sm:$0xf]
          %v1903 = vld [vmem:[%s1876 + $0x68] sm:$0xf]
          %v1904 = vld [vmem:[%s1876 + $0x6c] sm:$0xf]
          %v1905 = vld [vmem:[%s1876 + $0x70] sm:$0xf]
          %v1906 = vld [vmem:[%s1876 + $0x74] sm:$0xf]
          %v1907 = vld [vmem:[%s1876 + $0x78] sm:$0xf]
          %v1908 = vld [vmem:[%s1876 + $0x7c] sm:$0xf]
          %s1909 = scalar_lea.vmem [#allocation7], 384
          %v1910 = vld [vmem:[%s1909] sm:$0xff]
          %v1911 = vld [vmem:[%s1909 + $0x8] sm:$0xf]
          %v1912 = vld [vmem:[%s1909 + $0xc] sm:$0xff]
          %v1913 = vld [vmem:[%s1909 + $0x14] sm:$0xf]
          %v1914 = vld [vmem:[%s1909 + $0x18] sm:$0xff]
          %v1915 = vld [vmem:[%s1909 + $0x20] sm:$0xf]
          %v1916 = vld [vmem:[%s1909 + $0x24] sm:$0xff]
          %v1917 = vld [vmem:[%s1909 + $0x2c] sm:$0xf]
          %v1918 = vld [vmem:[%s1909 + $0x30] sm:$0xff]
          %v1919 = vld [vmem:[%s1909 + $0x38] sm:$0xf]
          %v1920 = vld [vmem:[%s1909 + $0x3c] sm:$0xff]
          %v1921 = vld [vmem:[%s1909 + $0x44] sm:$0xf]
          %v1922 = vld [vmem:[%s1909 + $0x48] sm:$0xff]
          %v1923 = vld [vmem:[%s1909 + $0x50] sm:$0xf]
          %v1924 = vld [vmem:[%s1909 + $0x54] sm:$0xff]
          %v1925 = vld [vmem:[%s1909 + $0x5c] sm:$0xf]
          %v1926 = vld [vmem:[%s1909 + $0x60] sm:$0xff]
          %v1927 = vld [vmem:[%s1909 + $0x68] sm:$0xf]
          %v1928 = vld [vmem:[%s1909 + $0x6c] sm:$0xff]
          %v1929 = vld [vmem:[%s1909 + $0x74] sm:$0xf]
          %v1930 = vld [vmem:[%s1909 + $0x78] sm:$0xff]
          %v1931 = vld [vmem:[%s1909 + $0x80] sm:$0xf]
          %v1932 = vld [vmem:[%s1909 + $0x84] sm:$0xff]
          %v1933 = vld [vmem:[%s1909 + $0x8c] sm:$0xf]
          %v1934 = vld [vmem:[%s1909 + $0x90] sm:$0xff]
          %v1935 = vld [vmem:[%s1909 + $0x98] sm:$0xf]
          %v1936 = vld [vmem:[%s1909 + $0x9c] sm:$0xff]
          %v1937 = vld [vmem:[%s1909 + $0xa4] sm:$0xf]
          %v1938 = vld [vmem:[%s1909 + $0xa8] sm:$0xff]
          %v1939 = vld [vmem:[%s1909 + $0xb0] sm:$0xf]
          %v1940 = vld [vmem:[%s1909 + $0xb4] sm:$0xff]
          %v1941 = vld [vmem:[%s1909 + $0xbc] sm:$0xf]
          %v1974 = vunpack.c.l.b16 %v1877
          %v1975 = vunpack.c.l.b16 %v1878
          %v1976 = vunpack.c.l.b16 %v1879
          %v1977 = vunpack.c.l.b16 %v1880
          %v1978 = vunpack.c.l.b16 %v1881
          %v1979 = vunpack.c.l.b16 %v1882
          %v1980 = vunpack.c.l.b16 %v1883
          %v1981 = vunpack.c.l.b16 %v1884
          %v1982 = vunpack.c.l.b16 %v1885
          %v1983 = vunpack.c.l.b16 %v1886
          %v1984 = vunpack.c.l.b16 %v1887
          %v1985 = vunpack.c.l.b16 %v1888
          %v1986 = vunpack.c.l.b16 %v1889
          %v1987 = vunpack.c.l.b16 %v1890
          %v1988 = vunpack.c.l.b16 %v1891
          %v1989 = vunpack.c.l.b16 %v1892
          %v1990 = vunpack.c.l.b16 %v1893
          %v1991 = vunpack.c.l.b16 %v1894
          %v1992 = vunpack.c.l.b16 %v1895
          %v1993 = vunpack.c.l.b16 %v1896
          %v1994 = vunpack.c.l.b16 %v1897
          %v1995 = vunpack.c.l.b16 %v1898
          %v1996 = vunpack.c.l.b16 %v1899
          %v1997 = vunpack.c.l.b16 %v1900
          %v1998 = vunpack.c.l.b16 %v1901
          %v1999 = vunpack.c.l.b16 %v1902
          %v2000 = vunpack.c.l.b16 %v1903
          %v2001 = vunpack.c.l.b16 %v1904
          %v2002 = vunpack.c.l.b16 %v1905
          %v2003 = vunpack.c.l.b16 %v1906
          %v2004 = vunpack.c.l.b16 %v1907
          %v2005 = vunpack.c.l.b16 %v1908
          %v2006 = vpack.c.b16 %v1975, %v1974
          %v2007 = vpack.c.b16 %v1977, %v1976
          %v2008 = vpack.c.b16 %v1979, %v1978
          %v2009 = vpack.c.b16 %v1981, %v1980
          %v2010 = vpack.c.b16 %v1983, %v1982
          %v2011 = vpack.c.b16 %v1985, %v1984
          %v2012 = vpack.c.b16 %v1987, %v1986
          %v2013 = vpack.c.b16 %v1989, %v1988
          %v2014 = vpack.c.b16 %v1991, %v1990
          %v2015 = vpack.c.b16 %v1993, %v1992
          %v2016 = vpack.c.b16 %v1995, %v1994
          %v2017 = vpack.c.b16 %v1997, %v1996
          %v2018 = vpack.c.b16 %v1999, %v1998
          %v2019 = vpack.c.b16 %v2001, %v2000
          %v2020 = vpack.c.b16 %v2003, %v2002
          %v2021 = vpack.c.b16 %v2005, %v2004
          %v2070 = vunpack.c.l.b16 %v1910
          %v2071 = vunpack.c.h.b16 %v1910
          %v2072 = vunpack.c.l.b16 %v1911
          %v2073 = vunpack.c.l.b16 %v1912
          %v2074 = vunpack.c.h.b16 %v1912
          %v2075 = vunpack.c.l.b16 %v1913
          %v2076 = vunpack.c.l.b16 %v1914
          %v2077 = vunpack.c.h.b16 %v1914
          %v2078 = vunpack.c.l.b16 %v1915
          %v2079 = vunpack.c.l.b16 %v1916
          %v2080 = vunpack.c.h.b16 %v1916
          %v2081 = vunpack.c.l.b16 %v1917
          %v2082 = vunpack.c.l.b16 %v1918
          %v2083 = vunpack.c.h.b16 %v1918
          %v2084 = vunpack.c.l.b16 %v1919
          %v2085 = vunpack.c.l.b16 %v1920
          %v2086 = vunpack.c.h.b16 %v1920
          %v2087 = vunpack.c.l.b16 %v1921
          %v2088 = vunpack.c.l.b16 %v1922
          %v2089 = vunpack.c.h.b16 %v1922
          %v2090 = vunpack.c.l.b16 %v1923
          %v2091 = vunpack.c.l.b16 %v1924
          %v2092 = vunpack.c.h.b16 %v1924
          %v2093 = vunpack.c.l.b16 %v1925
          %v2094 = vunpack.c.l.b16 %v1926
          %v2095 = vunpack.c.h.b16 %v1926
          %v2096 = vunpack.c.l.b16 %v1927
          %v2097 = vunpack.c.l.b16 %v1928
          %v2098 = vunpack.c.h.b16 %v1928
          %v2099 = vunpack.c.l.b16 %v1929
          %v2100 = vunpack.c.l.b16 %v1930
          %v2101 = vunpack.c.h.b16 %v1930
          %v2102 = vunpack.c.l.b16 %v1931
          %v2103 = vunpack.c.l.b16 %v1932
          %v2104 = vunpack.c.h.b16 %v1932
          %v2105 = vunpack.c.l.b16 %v1933
          %v2106 = vunpack.c.l.b16 %v1934
          %v2107 = vunpack.c.h.b16 %v1934
          %v2108 = vunpack.c.l.b16 %v1935
          %v2109 = vunpack.c.l.b16 %v1936
          %v2110 = vunpack.c.h.b16 %v1936
          %v2111 = vunpack.c.l.b16 %v1937
          %v2112 = vunpack.c.l.b16 %v1938
          %v2113 = vunpack.c.h.b16 %v1938
          %v2114 = vunpack.c.l.b16 %v1939
          %v2115 = vunpack.c.l.b16 %v1940
          %v2116 = vunpack.c.h.b16 %v1940
          %v2117 = vunpack.c.l.b16 %v1941
          %v2118 = vpack.c.b16 %v2073, %v2070
          %v2119 = vpack.c.b16 %v2074, %v2071
          %v2120 = vpack.c.b16 %v2075, %v2072
          %v2121 = vpack.c.b16 %v2079, %v2076
          %v2122 = vpack.c.b16 %v2080, %v2077
          %v2123 = vpack.c.b16 %v2081, %v2078
          %v2124 = vpack.c.b16 %v2085, %v2082
          %v2125 = vpack.c.b16 %v2086, %v2083
          %v2126 = vpack.c.b16 %v2087, %v2084
          %v2127 = vpack.c.b16 %v2091, %v2088
          %v2128 = vpack.c.b16 %v2092, %v2089
          %v2129 = vpack.c.b16 %v2093, %v2090
          %v2130 = vpack.c.b16 %v2097, %v2094
          %v2131 = vpack.c.b16 %v2098, %v2095
          %v2132 = vpack.c.b16 %v2099, %v2096
          %v2133 = vpack.c.b16 %v2103, %v2100
          %v2134 = vpack.c.b16 %v2104, %v2101
          %v2135 = vpack.c.b16 %v2105, %v2102
          %v2136 = vpack.c.b16 %v2109, %v2106
          %v2137 = vpack.c.b16 %v2110, %v2107
          %v2138 = vpack.c.b16 %v2111, %v2108
          %v2139 = vpack.c.b16 %v2115, %v2112
          %v2140 = vpack.c.b16 %v2116, %v2113
          %v2141 = vpack.c.b16 %v2117, %v2114
          %2166 = vmatprep.subr.bf16.mxu0 %v2140
          %2167 = vmatpush1.bf16.msra.mxu0 %v2139
          %2168 = vmatprep.subr.bf16.mxu0 %v2137
          %2169 = vmatpush1.bf16.msra.mxu0 %v2136
          %2170 = vmatprep.subr.bf16.mxu0 %v2134
          %2171 = vmatpush1.bf16.msra.mxu0 %v2133
          %2172 = vmatprep.subr.bf16.mxu0 %v2131
          %2173 = vmatpush1.bf16.msra.mxu0 %v2130
          %2174 = vmatprep.subr.bf16.mxu0 %v2128
          %2175 = vmatpush1.bf16.msra.mxu0 %v2127
          %2176 = vmatprep.subr.bf16.mxu0 %v2125
          %2177 = vmatpush1.bf16.msra.mxu0 %v2124
          %2178 = vmatprep.subr.bf16.mxu0 %v2122
          %2179 = vmatpush1.bf16.msra.mxu0 %v2121
          %2180 = vmatprep.subr.bf16.mxu0 %v2119
          %2181 = vmatpush1.bf16.msra.mxu0 %v2118
          %2182 = vmatprep.subr.bf16.mxu0 0
          %2183 = vmatpush2.bf16.msra.mxu0 0
          %2184 = vmatprep.subr.bf16.mxu0 0
          %2185 = vmatpush2.bf16.msra.mxu0 0
          %2186 = vmatprep.subr.bf16.mxu0 0
          %2187 = vmatpush2.bf16.msra.mxu0 0
          %2188 = vmatprep.subr.bf16.mxu0 0
          %2189 = vmatpush2.bf16.msra.mxu0 0
          %2190 = vmatprep.subr.bf16.mxu0 0
          %2191 = vmatpush2.bf16.msra.mxu0 0
          %2192 = vmatprep.subr.bf16.mxu0 0
          %2193 = vmatpush2.bf16.msra.mxu0 0
          %2194 = vmatprep.subr.bf16.mxu0 0
          %2195 = vmatpush2.bf16.msra.mxu0 0
          %2196 = vmatprep.subr.bf16.mxu0 0
          %2197 = vmatpush2.bf16.msra.mxu0 0
          %2198 = vmatprep.mubr.bf16.mxu0 0
          %2199 = vmatmul.mubr.bf16.gmra.mxu0 %v2006
          %v2200 = vpop.f32.mrf.mxu0
          %v2201 = vadd.f32 0.0, %v2200
          %v2202 = vpop.f32.mrf.mxu0
          %v2203 = vadd.f32 0.0, %v2202
          %v2204 = vpop.f32.mrf.mxu0
          %v2205 = vadd.f32 0.0, %v2204
          %v2206 = vpop.f32.mrf.mxu0
          %v2207 = vadd.f32 0.0, %v2206
          %2208 = vmatprep.mubr.bf16.mxu0 0
          %2209 = vmatmul.mubr.bf16.gmra.mxu0 %v2007
          %v2210 = vpop.f32.mrf.mxu0
          %v2211 = vadd.f32 0.0, %v2210
          %v2212 = vpop.f32.mrf.mxu0
          %v2213 = vadd.f32 0.0, %v2212
          %v2214 = vpop.f32.mrf.mxu0
          %v2215 = vadd.f32 0.0, %v2214
          %v2216 = vpop.f32.mrf.mxu0
          %v2217 = vadd.f32 0.0, %v2216
          %2218 = vmatprep.mubr.bf16.mxu0 0
          %2219 = vmatmul.mubr.bf16.gmra.mxu0 %v2008
          %v2220 = vpop.f32.mrf.mxu0
          %v2221 = vadd.f32 0.0, %v2220
          %v2222 = vpop.f32.mrf.mxu0
          %v2223 = vadd.f32 0.0, %v2222
          %v2224 = vpop.f32.mrf.mxu0
          %v2225 = vadd.f32 0.0, %v2224
          %v2226 = vpop.f32.mrf.mxu0
          %v2227 = vadd.f32 0.0, %v2226
          %2228 = vmatprep.mubr.bf16.mxu0 0
          %2229 = vmatmul.mubr.bf16.gmra.mxu0 %v2009
          %v2230 = vpop.f32.mrf.mxu0
          %v2231 = vadd.f32 0.0, %v2230
          %v2232 = vpop.f32.mrf.mxu0
          %v2233 = vadd.f32 0.0, %v2232
          %v2234 = vpop.f32.mrf.mxu0
          %v2235 = vadd.f32 0.0, %v2234
          %v2236 = vpop.f32.mrf.mxu0
          %v2237 = vadd.f32 0.0, %v2236
          %2238 = vmatprep.mubr.bf16.mxu0 0
          %2239 = vmatmul.mubr.bf16.gmra.mxu0 %v2010
          %v2240 = vpop.f32.mrf.mxu0
          %v2241 = vadd.f32 0.0, %v2240
          %v2242 = vpop.f32.mrf.mxu0
          %v2243 = vadd.f32 0.0, %v2242
          %v2244 = vpop.f32.mrf.mxu0
          %v2245 = vadd.f32 0.0, %v2244
          %v2246 = vpop.f32.mrf.mxu0
          %v2247 = vadd.f32 0.0, %v2246
          %2248 = vmatprep.mubr.bf16.mxu0 0
          %2249 = vmatmul.mubr.bf16.gmra.mxu0 %v2011
          %v2250 = vpop.f32.mrf.mxu0
          %v2251 = vadd.f32 0.0, %v2250
          %v2252 = vpop.f32.mrf.mxu0
          %v2253 = vadd.f32 0.0, %v2252
          %v2254 = vpop.f32.mrf.mxu0
          %v2255 = vadd.f32 0.0, %v2254
          %v2256 = vpop.f32.mrf.mxu0
          %v2257 = vadd.f32 0.0, %v2256
          %2258 = vmatprep.mubr.bf16.mxu0 0
          %2259 = vmatmul.mubr.bf16.gmra.mxu0 %v2012
          %v2260 = vpop.f32.mrf.mxu0
          %v2261 = vadd.f32 0.0, %v2260
          %v2262 = vpop.f32.mrf.mxu0
          %v2263 = vadd.f32 0.0, %v2262
          %v2264 = vpop.f32.mrf.mxu0
          %v2265 = vadd.f32 0.0, %v2264
          %v2266 = vpop.f32.mrf.mxu0
          %v2267 = vadd.f32 0.0, %v2266
          %2268 = vmatprep.mubr.bf16.mxu0 0
          %2269 = vmatmul.mubr.bf16.gmra.mxu0 %v2013
          %v2270 = vpop.f32.mrf.mxu0
          %v2271 = vadd.f32 0.0, %v2270
          %v2272 = vpop.f32.mrf.mxu0
          %v2273 = vadd.f32 0.0, %v2272
          %v2274 = vpop.f32.mrf.mxu0
          %v2275 = vadd.f32 0.0, %v2274
          %v2276 = vpop.f32.mrf.mxu0
          %v2277 = vadd.f32 0.0, %v2276
          %2278 = vmatprep.mubr.bf16.mxu0 0
          %2279 = vmatmul.mubr.bf16.gmra.mxu0 %v2014
          %v2280 = vpop.f32.mrf.mxu0
          %v2281 = vadd.f32 0.0, %v2280
          %v2282 = vpop.f32.mrf.mxu0
          %v2283 = vadd.f32 0.0, %v2282
          %v2284 = vpop.f32.mrf.mxu0
          %v2285 = vadd.f32 0.0, %v2284
          %v2286 = vpop.f32.mrf.mxu0
          %v2287 = vadd.f32 0.0, %v2286
          %2288 = vmatprep.mubr.bf16.mxu0 0
          %2289 = vmatmul.mubr.bf16.gmra.mxu0 %v2015
          %v2290 = vpop.f32.mrf.mxu0
          %v2291 = vadd.f32 0.0, %v2290
          %v2292 = vpop.f32.mrf.mxu0
          %v2293 = vadd.f32 0.0, %v2292
          %v2294 = vpop.f32.mrf.mxu0
          %v2295 = vadd.f32 0.0, %v2294
          %v2296 = vpop.f32.mrf.mxu0
          %v2297 = vadd.f32 0.0, %v2296
          %2298 = vmatprep.mubr.bf16.mxu0 0
          %2299 = vmatmul.mubr.bf16.gmra.mxu0 %v2016
          %v2300 = vpop.f32.mrf.mxu0
          %v2301 = vadd.f32 0.0, %v2300
          %v2302 = vpop.f32.mrf.mxu0
          %v2303 = vadd.f32 0.0, %v2302
          %v2304 = vpop.f32.mrf.mxu0
          %v2305 = vadd.f32 0.0, %v2304
          %v2306 = vpop.f32.mrf.mxu0
          %v2307 = vadd.f32 0.0, %v2306
          %2308 = vmatprep.mubr.bf16.mxu0 0
          %2309 = vmatmul.mubr.bf16.gmra.mxu0 %v2017
          %v2310 = vpop.f32.mrf.mxu0
          %v2311 = vadd.f32 0.0, %v2310
          %v2312 = vpop.f32.mrf.mxu0
          %v2313 = vadd.f32 0.0, %v2312
          %v2314 = vpop.f32.mrf.mxu0
          %v2315 = vadd.f32 0.0, %v2314
          %v2316 = vpop.f32.mrf.mxu0
          %v2317 = vadd.f32 0.0, %v2316
          %2318 = vmatprep.mubr.bf16.mxu0 0
          %2319 = vmatmul.mubr.bf16.gmra.mxu0 %v2018
          %v2320 = vpop.f32.mrf.mxu0
          %v2321 = vadd.f32 0.0, %v2320
          %v2322 = vpop.f32.mrf.mxu0
          %v2323 = vadd.f32 0.0, %v2322
          %v2324 = vpop.f32.mrf.mxu0
          %v2325 = vadd.f32 0.0, %v2324
          %v2326 = vpop.f32.mrf.mxu0
          %v2327 = vadd.f32 0.0, %v2326
          %2328 = vmatprep.mubr.bf16.mxu0 0
          %2329 = vmatmul.mubr.bf16.gmra.mxu0 %v2019
          %v2330 = vpop.f32.mrf.mxu0
          %v2331 = vadd.f32 0.0, %v2330
          %v2332 = vpop.f32.mrf.mxu0
          %v2333 = vadd.f32 0.0, %v2332
          %v2334 = vpop.f32.mrf.mxu0
          %v2335 = vadd.f32 0.0, %v2334
          %v2336 = vpop.f32.mrf.mxu0
          %v2337 = vadd.f32 0.0, %v2336
          %2338 = vmatprep.mubr.bf16.mxu0 0
          %2339 = vmatmul.mubr.bf16.gmra.mxu0 %v2020
          %v2340 = vpop.f32.mrf.mxu0
          %v2341 = vadd.f32 0.0, %v2340
          %v2342 = vpop.f32.mrf.mxu0
          %v2343 = vadd.f32 0.0, %v2342
          %v2344 = vpop.f32.mrf.mxu0
          %v2345 = vadd.f32 0.0, %v2344
          %v2346 = vpop.f32.mrf.mxu0
          %v2347 = vadd.f32 0.0, %v2346
          %2348 = vmatprep.mubr.bf16.mxu0 0
          %2349 = vmatmul.mubr.bf16.gmra.mxu0 %v2021
          %v2350 = vpop.f32.mrf.mxu0
          %v2351 = vadd.f32 0.0, %v2350
          %v2352 = vpop.f32.mrf.mxu0
          %v2353 = vadd.f32 0.0, %v2352
          %v2354 = vpop.f32.mrf.mxu0
          %v2355 = vadd.f32 0.0, %v2354
          %v2356 = vpop.f32.mrf.mxu0
          %v2357 = vadd.f32 0.0, %v2356
          %2358 = vdwg.mxu0
          %2359 = vmatprep.subr.bf16.mxu0 0
          %2360 = vmatpush1.bf16.msra.mxu0 %v2141
          %2361 = vmatprep.subr.bf16.mxu0 0
          %2362 = vmatpush1.bf16.msra.mxu0 %v2138
          %2363 = vmatprep.subr.bf16.mxu0 0
          %2364 = vmatpush1.bf16.msra.mxu0 %v2135
          %2365 = vmatprep.subr.bf16.mxu0 0
          %2366 = vmatpush1.bf16.msra.mxu0 %v2132
          %2367 = vmatprep.subr.bf16.mxu0 0
          %2368 = vmatpush1.bf16.msra.mxu0 %v2129
          %2369 = vmatprep.subr.bf16.mxu0 0
          %2370 = vmatpush1.bf16.msra.mxu0 %v2126
          %2371 = vmatprep.subr.bf16.mxu0 0
          %2372 = vmatpush1.bf16.msra.mxu0 %v2123
          %2373 = vmatprep.subr.bf16.mxu0 0
          %2374 = vmatpush1.bf16.msra.mxu0 %v2120
          %2375 = vmatprep.subr.bf16.mxu0 0
          %2376 = vmatpush2.bf16.msra.mxu0 0
          %2377 = vmatprep.subr.bf16.mxu0 0
          %2378 = vmatpush2.bf16.msra.mxu0 0
          %2379 = vmatprep.subr.bf16.mxu0 0
          %2380 = vmatpush2.bf16.msra.mxu0 0
          %2381 = vmatprep.subr.bf16.mxu0 0
          %2382 = vmatpush2.bf16.msra.mxu0 0
          %2383 = vmatprep.subr.bf16.mxu0 0
          %2384 = vmatpush2.bf16.msra.mxu0 0
          %2385 = vmatprep.subr.bf16.mxu0 0
          %2386 = vmatpush2.bf16.msra.mxu0 0
          %2387 = vmatprep.subr.bf16.mxu0 0
          %2388 = vmatpush2.bf16.msra.mxu0 0
          %2389 = vmatprep.subr.bf16.mxu0 0
          %2390 = vmatpush2.bf16.msra.mxu0 0
          %2391 = vmatprep.mubr.bf16.mxu0 0
          %2392 = vmatmul.mubr.bf16.gmra.mxu0 %v2006
          %v2393 = vpop.f32.mrf.mxu0
          %v2394 = vadd.f32 0.0, %v2393
          %v2395 = vpop.f32.mrf.mxu0
          %v2396 = vpop.f32.mrf.mxu0
          %v2397 = vadd.f32 0.0, %v2396
          %v2398 = vpop.f32.mrf.mxu0
          %2399 = vmatprep.mubr.bf16.mxu0 0
          %2400 = vmatmul.mubr.bf16.gmra.mxu0 %v2007
          %v2401 = vpop.f32.mrf.mxu0
          %v2402 = vadd.f32 0.0, %v2401
          %v2403 = vpop.f32.mrf.mxu0
          %v2404 = vpop.f32.mrf.mxu0
          %v2405 = vadd.f32 0.0, %v2404
          %v2406 = vpop.f32.mrf.mxu0
          %2407 = vmatprep.mubr.bf16.mxu0 0
          %2408 = vmatmul.mubr.bf16.gmra.mxu0 %v2008
          %v2409 = vpop.f32.mrf.mxu0
          %v2410 = vadd.f32 0.0, %v2409
          %v2411 = vpop.f32.mrf.mxu0
          %v2412 = vpop.f32.mrf.mxu0
          %v2413 = vadd.f32 0.0, %v2412
          %v2414 = vpop.f32.mrf.mxu0
          %2415 = vmatprep.mubr.bf16.mxu0 0
          %2416 = vmatmul.mubr.bf16.gmra.mxu0 %v2009
          %v2417 = vpop.f32.mrf.mxu0
          %v2418 = vadd.f32 0.0, %v2417
          %v2419 = vpop.f32.mrf.mxu0
          %v2420 = vpop.f32.mrf.mxu0
          %v2421 = vadd.f32 0.0, %v2420
          %v2422 = vpop.f32.mrf.mxu0
          %2423 = vmatprep.mubr.bf16.mxu0 0
          %2424 = vmatmul.mubr.bf16.gmra.mxu0 %v2010
          %v2425 = vpop.f32.mrf.mxu0
          %v2426 = vadd.f32 0.0, %v2425
          %v2427 = vpop.f32.mrf.mxu0
          %v2428 = vpop.f32.mrf.mxu0
          %v2429 = vadd.f32 0.0, %v2428
          %v2430 = vpop.f32.mrf.mxu0
          %2431 = vmatprep.mubr.bf16.mxu0 0
          %2432 = vmatmul.mubr.bf16.gmra.mxu0 %v2011
          %v2433 = vpop.f32.mrf.mxu0
          %v2434 = vadd.f32 0.0, %v2433
          %v2435 = vpop.f32.mrf.mxu0
          %v2436 = vpop.f32.mrf.mxu0
          %v2437 = vadd.f32 0.0, %v2436
          %v2438 = vpop.f32.mrf.mxu0
          %2439 = vmatprep.mubr.bf16.mxu0 0
          %2440 = vmatmul.mubr.bf16.gmra.mxu0 %v2012
          %v2441 = vpop.f32.mrf.mxu0
          %v2442 = vadd.f32 0.0, %v2441
          %v2443 = vpop.f32.mrf.mxu0
          %v2444 = vpop.f32.mrf.mxu0
          %v2445 = vadd.f32 0.0, %v2444
          %v2446 = vpop.f32.mrf.mxu0
          %2447 = vmatprep.mubr.bf16.mxu0 0
          %2448 = vmatmul.mubr.bf16.gmra.mxu0 %v2013
          %v2449 = vpop.f32.mrf.mxu0
          %v2450 = vadd.f32 0.0, %v2449
          %v2451 = vpop.f32.mrf.mxu0
          %v2452 = vpop.f32.mrf.mxu0
          %v2453 = vadd.f32 0.0, %v2452
          %v2454 = vpop.f32.mrf.mxu0
          %2455 = vmatprep.mubr.bf16.mxu0 0
          %2456 = vmatmul.mubr.bf16.gmra.mxu0 %v2014
          %v2457 = vpop.f32.mrf.mxu0
          %v2458 = vadd.f32 0.0, %v2457
          %v2459 = vpop.f32.mrf.mxu0
          %v2460 = vpop.f32.mrf.mxu0
          %v2461 = vadd.f32 0.0, %v2460
          %v2462 = vpop.f32.mrf.mxu0
          %2463 = vmatprep.mubr.bf16.mxu0 0
          %2464 = vmatmul.mubr.bf16.gmra.mxu0 %v2015
          %v2465 = vpop.f32.mrf.mxu0
          %v2466 = vadd.f32 0.0, %v2465
          %v2467 = vpop.f32.mrf.mxu0
          %v2468 = vpop.f32.mrf.mxu0
          %v2469 = vadd.f32 0.0, %v2468
          %v2470 = vpop.f32.mrf.mxu0
          %2471 = vmatprep.mubr.bf16.mxu0 0
          %2472 = vmatmul.mubr.bf16.gmra.mxu0 %v2016
          %v2473 = vpop.f32.mrf.mxu0
          %v2474 = vadd.f32 0.0, %v2473
          %v2475 = vpop.f32.mrf.mxu0
          %v2476 = vpop.f32.mrf.mxu0
          %v2477 = vadd.f32 0.0, %v2476
          %v2478 = vpop.f32.mrf.mxu0
          %2479 = vmatprep.mubr.bf16.mxu0 0
          %2480 = vmatmul.mubr.bf16.gmra.mxu0 %v2017
          %v2481 = vpop.f32.mrf.mxu0
          %v2482 = vadd.f32 0.0, %v2481
          %v2483 = vpop.f32.mrf.mxu0
          %v2484 = vpop.f32.mrf.mxu0
          %v2485 = vadd.f32 0.0, %v2484
          %v2486 = vpop.f32.mrf.mxu0
          %2487 = vmatprep.mubr.bf16.mxu0 0
          %2488 = vmatmul.mubr.bf16.gmra.mxu0 %v2018
          %v2489 = vpop.f32.mrf.mxu0
          %v2490 = vadd.f32 0.0, %v2489
          %v2491 = vpop.f32.mrf.mxu0
          %v2492 = vpop.f32.mrf.mxu0
          %v2493 = vadd.f32 0.0, %v2492
          %v2494 = vpop.f32.mrf.mxu0
          %2495 = vmatprep.mubr.bf16.mxu0 0
          %2496 = vmatmul.mubr.bf16.gmra.mxu0 %v2019
          %v2497 = vpop.f32.mrf.mxu0
          %v2498 = vadd.f32 0.0, %v2497
          %v2499 = vpop.f32.mrf.mxu0
          %v2500 = vpop.f32.mrf.mxu0
          %v2501 = vadd.f32 0.0, %v2500
          %v2502 = vpop.f32.mrf.mxu0
          %2503 = vmatprep.mubr.bf16.mxu0 0
          %2504 = vmatmul.mubr.bf16.gmra.mxu0 %v2020
          %v2505 = vpop.f32.mrf.mxu0
          %v2506 = vadd.f32 0.0, %v2505
          %v2507 = vpop.f32.mrf.mxu0
          %v2508 = vpop.f32.mrf.mxu0
          %v2509 = vadd.f32 0.0, %v2508
          %v2510 = vpop.f32.mrf.mxu0
          %2511 = vmatprep.mubr.bf16.mxu0 0
          %2512 = vmatmul.mubr.bf16.gmra.mxu0 %v2021
          %v2513 = vpop.f32.mrf.mxu0
          %v2514 = vadd.f32 0.0, %v2513
          %v2515 = vpop.f32.mrf.mxu0
          %v2516 = vpop.f32.mrf.mxu0
          %v2517 = vadd.f32 0.0, %v2516
          %v2518 = vpop.f32.mrf.mxu0
          %2519 = vdwg.mxu0
          %v2520 = vadd.f32 %v1780, %v2201
          %v2521 = vadd.f32 %v1781, %v2205
          %v2522 = vadd.f32 %v1782, %v2211
          %v2523 = vadd.f32 %v1783, %v2215
          %v2524 = vadd.f32 %v1784, %v2221
          %v2525 = vadd.f32 %v1785, %v2225
          %v2526 = vadd.f32 %v1786, %v2231
          %v2527 = vadd.f32 %v1787, %v2235
          %v2528 = vadd.f32 %v1788, %v2241
          %v2529 = vadd.f32 %v1789, %v2245
          %v2530 = vadd.f32 %v1790, %v2251
          %v2531 = vadd.f32 %v1791, %v2255
          %v2532 = vadd.f32 %v1792, %v2261
          %v2533 = vadd.f32 %v1793, %v2265
          %v2534 = vadd.f32 %v1794, %v2271
          %v2535 = vadd.f32 %v1795, %v2275
          %v2536 = vadd.f32 %v1796, %v2281
          %v2537 = vadd.f32 %v1797, %v2285
          %v2538 = vadd.f32 %v1798, %v2291
          %v2539 = vadd.f32 %v1799, %v2295
          %v2540 = vadd.f32 %v1800, %v2301
          %v2541 = vadd.f32 %v1801, %v2305
          %v2542 = vadd.f32 %v1802, %v2311
          %v2543 = vadd.f32 %v1803, %v2315
          %v2544 = vadd.f32 %v1804, %v2321
          %v2545 = vadd.f32 %v1805, %v2325
          %v2546 = vadd.f32 %v1806, %v2331
          %v2547 = vadd.f32 %v1807, %v2335
          %v2548 = vadd.f32 %v1808, %v2341
          %v2549 = vadd.f32 %v1809, %v2345
          %v2550 = vadd.f32 %v1810, %v2351
          %v2551 = vadd.f32 %v1811, %v2355
          %v2552 = vadd.f32 %v1812, %v2203
          %v2553 = vadd.f32 %v1813, %v2207
          %v2554 = vadd.f32 %v1814, %v2213
          %v2555 = vadd.f32 %v1815, %v2217
          %v2556 = vadd.f32 %v1816, %v2223
          %v2557 = vadd.f32 %v1817, %v2227
          %v2558 = vadd.f32 %v1818, %v2233
          %v2559 = vadd.f32 %v1819, %v2237
          %v2560 = vadd.f32 %v1820, %v2243
          %v2561 = vadd.f32 %v1821, %v2247
          %v2562 = vadd.f32 %v1822, %v2253
          %v2563 = vadd.f32 %v1823, %v2257
          %v2564 = vadd.f32 %v1824, %v2263
          %v2565 = vadd.f32 %v1825, %v2267
          %v2566 = vadd.f32 %v1826, %v2273
          %v2567 = vadd.f32 %v1827, %v2277
          %v2568 = vadd.f32 %v1828, %v2283
          %v2569 = vadd.f32 %v1829, %v2287
          %v2570 = vadd.f32 %v1830, %v2293
          %v2571 = vadd.f32 %v1831, %v2297
          %v2572 = vadd.f32 %v1832, %v2303
          %v2573 = vadd.f32 %v1833, %v2307
          %v2574 = vadd.f32 %v1834, %v2313
          %v2575 = vadd.f32 %v1835, %v2317
          %v2576 = vadd.f32 %v1836, %v2323
          %v2577 = vadd.f32 %v1837, %v2327
          %v2578 = vadd.f32 %v1838, %v2333
          %v2579 = vadd.f32 %v1839, %v2337
          %v2580 = vadd.f32 %v1840, %v2343
          %v2581 = vadd.f32 %v1841, %v2347
          %v2582 = vadd.f32 %v1842, %v2353
          %v2583 = vadd.f32 %v1843, %v2357
          %v2584 = vadd.f32 %v1844, %v2394
          %v2585 = vadd.f32 %v1845, %v2397
          %v2586 = vadd.f32 %v1846, %v2402
          %v2587 = vadd.f32 %v1847, %v2405
          %v2588 = vadd.f32 %v1848, %v2410
          %v2589 = vadd.f32 %v1849, %v2413
          %v2590 = vadd.f32 %v1850, %v2418
          %v2591 = vadd.f32 %v1851, %v2421
          %v2592 = vadd.f32 %v1852, %v2426
          %v2593 = vadd.f32 %v1853, %v2429
          %v2594 = vadd.f32 %v1854, %v2434
          %v2595 = vadd.f32 %v1855, %v2437
          %v2596 = vadd.f32 %v1856, %v2442
          %v2597 = vadd.f32 %v1857, %v2445
          %v2598 = vadd.f32 %v1858, %v2450
          %v2599 = vadd.f32 %v1859, %v2453
          %v2600 = vadd.f32 %v1860, %v2458
          %v2601 = vadd.f32 %v1861, %v2461
          %v2602 = vadd.f32 %v1862, %v2466
          %v2603 = vadd.f32 %v1863, %v2469
          %v2604 = vadd.f32 %v1864, %v2474
          %v2605 = vadd.f32 %v1865, %v2477
          %v2606 = vadd.f32 %v1866, %v2482
          %v2607 = vadd.f32 %v1867, %v2485
          %v2608 = vadd.f32 %v1868, %v2490
          %v2609 = vadd.f32 %v1869, %v2493
          %v2610 = vadd.f32 %v1870, %v2498
          %v2611 = vadd.f32 %v1871, %v2501
          %v2612 = vadd.f32 %v1872, %v2506
          %v2613 = vadd.f32 %v1873, %v2509
          %v2614 = vadd.f32 %v1874, %v2514
          %v2615 = vadd.f32 %v1875, %v2517
          %2616 = vst [vmem:[#allocation3 + $0x1] sm:$0xff] %v2520
          %2617 = vst [vmem:[#allocation3 + $0x9] sm:$0xff] %v2521
          %2618 = vst [vmem:[#allocation3 + $0x19] sm:$0xff] %v2522
          %2619 = vst [vmem:[#allocation3 + $0x21] sm:$0xff] %v2523
          %2620 = vst [vmem:[#allocation3 + $0x31] sm:$0xff] %v2524
          %2621 = vst [vmem:[#allocation3 + $0x39] sm:$0xff] %v2525
          %2622 = vst [vmem:[#allocation3 + $0x49] sm:$0xff] %v2526
          %2623 = vst [vmem:[#allocation3 + $0x51] sm:$0xff] %v2527
          %2624 = vst [vmem:[#allocation3 + $0x61] sm:$0xff] %v2528
          %2625 = vst [vmem:[#allocation3 + $0x69] sm:$0xff] %v2529
          %2626 = vst [vmem:[#allocation3 + $0x79] sm:$0xff] %v2530
          %2627 = vst [vmem:[#allocation3 + $0x81] sm:$0xff] %v2531
          %2628 = vst [vmem:[#allocation3 + $0x91] sm:$0xff] %v2532
          %2629 = vst [vmem:[#allocation3 + $0x99] sm:$0xff] %v2533
          %2630 = vst [vmem:[#allocation3 + $0xa9] sm:$0xff] %v2534
          %2631 = vst [vmem:[#allocation3 + $0xb1] sm:$0xff] %v2535
          %2632 = vst [vmem:[#allocation3 + $0xc1] sm:$0xff] %v2536
          %2633 = vst [vmem:[#allocation3 + $0xc9] sm:$0xff] %v2537
          %2634 = vst [vmem:[#allocation3 + $0xd9] sm:$0xff] %v2538
          %2635 = vst [vmem:[#allocation3 + $0xe1] sm:$0xff] %v2539
          %2636 = vst [vmem:[#allocation3 + $0xf1] sm:$0xff] %v2540
          %2637 = vst [vmem:[#allocation3 + $0xf9] sm:$0xff] %v2541
          %2638 = vst [vmem:[#allocation3 + $0x109] sm:$0xff] %v2542
          %2639 = vst [vmem:[#allocation3 + $0x111] sm:$0xff] %v2543
          %2640 = vst [vmem:[#allocation3 + $0x121] sm:$0xff] %v2544
          %2641 = vst [vmem:[#allocation3 + $0x129] sm:$0xff] %v2545
          %2642 = vst [vmem:[#allocation3 + $0x139] sm:$0xff] %v2546
          %2643 = vst [vmem:[#allocation3 + $0x141] sm:$0xff] %v2547
          %2644 = vst [vmem:[#allocation3 + $0x151] sm:$0xff] %v2548
          %2645 = vst [vmem:[#allocation3 + $0x159] sm:$0xff] %v2549
          %2646 = vst [vmem:[#allocation3 + $0x169] sm:$0xff] %v2550
          %2647 = vst [vmem:[#allocation3 + $0x171] sm:$0xff] %v2551
          %v2648 = vld [vmem:[#allocation3] sm:$0xff]
          %v2649 = vld [vmem:[#allocation3 + $0x8] sm:$0xff]
          %v2650 = vld [vmem:[#allocation3 + $0x18] sm:$0xff]
          %v2651 = vld [vmem:[#allocation3 + $0x20] sm:$0xff]
          %v2652 = vld [vmem:[#allocation3 + $0x30] sm:$0xff]
          %v2653 = vld [vmem:[#allocation3 + $0x38] sm:$0xff]
          %v2654 = vld [vmem:[#allocation3 + $0x48] sm:$0xff]
          %v2655 = vld [vmem:[#allocation3 + $0x50] sm:$0xff]
          %v2656 = vld [vmem:[#allocation3 + $0x60] sm:$0xff]
          %v2657 = vld [vmem:[#allocation3 + $0x68] sm:$0xff]
          %v2658 = vld [vmem:[#allocation3 + $0x78] sm:$0xff]
          %v2659 = vld [vmem:[#allocation3 + $0x80] sm:$0xff]
          %v2660 = vld [vmem:[#allocation3 + $0x90] sm:$0xff]
          %v2661 = vld [vmem:[#allocation3 + $0x98] sm:$0xff]
          %v2662 = vld [vmem:[#allocation3 + $0xa8] sm:$0xff]
          %v2663 = vld [vmem:[#allocation3 + $0xb0] sm:$0xff]
          %v2664 = vld [vmem:[#allocation3 + $0xc0] sm:$0xff]
          %v2665 = vld [vmem:[#allocation3 + $0xc8] sm:$0xff]
          %v2666 = vld [vmem:[#allocation3 + $0xd8] sm:$0xff]
          %v2667 = vld [vmem:[#allocation3 + $0xe0] sm:$0xff]
          %v2668 = vld [vmem:[#allocation3 + $0xf0] sm:$0xff]
          %v2669 = vld [vmem:[#allocation3 + $0xf8] sm:$0xff]
          %v2670 = vld [vmem:[#allocation3 + $0x108] sm:$0xff]
          %v2671 = vld [vmem:[#allocation3 + $0x110] sm:$0xff]
          %v2672 = vld [vmem:[#allocation3 + $0x120] sm:$0xff]
          %v2673 = vld [vmem:[#allocation3 + $0x128] sm:$0xff]
          %v2674 = vld [vmem:[#allocation3 + $0x138] sm:$0xff]
          %v2675 = vld [vmem:[#allocation3 + $0x140] sm:$0xff]
          %v2676 = vld [vmem:[#allocation3 + $0x150] sm:$0xff]
          %v2677 = vld [vmem:[#allocation3 + $0x158] sm:$0xff]
          %v2678 = vld [vmem:[#allocation3 + $0x168] sm:$0xff]
          %v2679 = vld [vmem:[#allocation3 + $0x170] sm:$0xff]
          %v2680 = vadd.f32 %v2552, %v2648
          %v2681 = vadd.f32 %v2553, %v2649
          %v2682 = vadd.f32 %v2554, %v2650
          %v2683 = vadd.f32 %v2555, %v2651
          %v2684 = vadd.f32 %v2556, %v2652
          %v2685 = vadd.f32 %v2557, %v2653
          %v2686 = vadd.f32 %v2558, %v2654
          %v2687 = vadd.f32 %v2559, %v2655
          %v2688 = vadd.f32 %v2560, %v2656
          %v2689 = vadd.f32 %v2561, %v2657
          %v2690 = vadd.f32 %v2562, %v2658
          %v2691 = vadd.f32 %v2563, %v2659
          %v2692 = vadd.f32 %v2564, %v2660
          %v2693 = vadd.f32 %v2565, %v2661
          %v2694 = vadd.f32 %v2566, %v2662
          %v2695 = vadd.f32 %v2567, %v2663
          %v2696 = vadd.f32 %v2568, %v2664
          %v2697 = vadd.f32 %v2569, %v2665
          %v2698 = vadd.f32 %v2570, %v2666
          %v2699 = vadd.f32 %v2571, %v2667
          %v2700 = vadd.f32 %v2572, %v2668
          %v2701 = vadd.f32 %v2573, %v2669
          %v2702 = vadd.f32 %v2574, %v2670
          %v2703 = vadd.f32 %v2575, %v2671
          %v2704 = vadd.f32 %v2576, %v2672
          %v2705 = vadd.f32 %v2577, %v2673
          %v2706 = vadd.f32 %v2578, %v2674
          %v2707 = vadd.f32 %v2579, %v2675
          %v2708 = vadd.f32 %v2580, %v2676
          %v2709 = vadd.f32 %v2581, %v2677
          %v2710 = vadd.f32 %v2582, %v2678
          %v2711 = vadd.f32 %v2583, %v2679
          %2712 = vst [vmem:[#allocation3 + $0x1] sm:$0xff] %v2584
          %2713 = vst [vmem:[#allocation3 + $0x9] sm:$0xff] %v2585
          %2714 = vst [vmem:[#allocation3 + $0x19] sm:$0xff] %v2586
          %2715 = vst [vmem:[#allocation3 + $0x21] sm:$0xff] %v2587
          %2716 = vst [vmem:[#allocation3 + $0x31] sm:$0xff] %v2588
          %2717 = vst [vmem:[#allocation3 + $0x39] sm:$0xff] %v2589
          %2718 = vst [vmem:[#allocation3 + $0x49] sm:$0xff] %v2590
          %2719 = vst [vmem:[#allocation3 + $0x51] sm:$0xff] %v2591
          %2720 = vst [vmem:[#allocation3 + $0x61] sm:$0xff] %v2592
          %2721 = vst [vmem:[#allocation3 + $0x69] sm:$0xff] %v2593
          %2722 = vst [vmem:[#allocation3 + $0x79] sm:$0xff] %v2594
          %2723 = vst [vmem:[#allocation3 + $0x81] sm:$0xff] %v2595
          %2724 = vst [vmem:[#allocation3 + $0x91] sm:$0xff] %v2596
          %2725 = vst [vmem:[#allocation3 + $0x99] sm:$0xff] %v2597
          %2726 = vst [vmem:[#allocation3 + $0xa9] sm:$0xff] %v2598
          %2727 = vst [vmem:[#allocation3 + $0xb1] sm:$0xff] %v2599
          %2728 = vst [vmem:[#allocation3 + $0xc1] sm:$0xff] %v2600
          %2729 = vst [vmem:[#allocation3 + $0xc9] sm:$0xff] %v2601
          %2730 = vst [vmem:[#allocation3 + $0xd9] sm:$0xff] %v2602
          %2731 = vst [vmem:[#allocation3 + $0xe1] sm:$0xff] %v2603
          %2732 = vst [vmem:[#allocation3 + $0xf1] sm:$0xff] %v2604
          %2733 = vst [vmem:[#allocation3 + $0xf9] sm:$0xff] %v2605
          %2734 = vst [vmem:[#allocation3 + $0x109] sm:$0xff] %v2606
          %2735 = vst [vmem:[#allocation3 + $0x111] sm:$0xff] %v2607
          %2736 = vst [vmem:[#allocation3 + $0x121] sm:$0xff] %v2608
          %2737 = vst [vmem:[#allocation3 + $0x129] sm:$0xff] %v2609
          %2738 = vst [vmem:[#allocation3 + $0x139] sm:$0xff] %v2610
          %2739 = vst [vmem:[#allocation3 + $0x141] sm:$0xff] %v2611
          %2740 = vst [vmem:[#allocation3 + $0x151] sm:$0xff] %v2612
          %2741 = vst [vmem:[#allocation3 + $0x159] sm:$0xff] %v2613
          %2742 = vst [vmem:[#allocation3 + $0x169] sm:$0xff] %v2614
          %2743 = vst [vmem:[#allocation3 + $0x171] sm:$0xff] %v2615
          %v2744 = vld [vmem:[#allocation3 + $0x2] sm:$0xff]
          %v2745 = vld [vmem:[#allocation3 + $0xa] sm:$0xff]
          %v2746 = vld [vmem:[#allocation3 + $0x1a] sm:$0xff]
          %v2747 = vld [vmem:[#allocation3 + $0x22] sm:$0xff]
          %v2748 = vld [vmem:[#allocation3 + $0x32] sm:$0xff]
          %v2749 = vld [vmem:[#allocation3 + $0x3a] sm:$0xff]
          %v2750 = vld [vmem:[#allocation3 + $0x4a] sm:$0xff]
          %v2751 = vld [vmem:[#allocation3 + $0x52] sm:$0xff]
          %v2752 = vld [vmem:[#allocation3 + $0x62] sm:$0xff]
          %v2753 = vld [vmem:[#allocation3 + $0x6a] sm:$0xff]
          %v2754 = vld [vmem:[#allocation3 + $0x7a] sm:$0xff]
          %v2755 = vld [vmem:[#allocation3 + $0x82] sm:$0xff]
          %v2756 = vld [vmem:[#allocation3 + $0x92] sm:$0xff]
          %v2757 = vld [vmem:[#allocation3 + $0x9a] sm:$0xff]
          %v2758 = vld [vmem:[#allocation3 + $0xaa] sm:$0xff]
          %v2759 = vld [vmem:[#allocation3 + $0xb2] sm:$0xff]
          %v2760 = vld [vmem:[#allocation3 + $0xc2] sm:$0xff]
          %v2761 = vld [vmem:[#allocation3 + $0xca] sm:$0xff]
          %v2762 = vld [vmem:[#allocation3 + $0xda] sm:$0xff]
          %v2763 = vld [vmem:[#allocation3 + $0xe2] sm:$0xff]
          %v2764 = vld [vmem:[#allocation3 + $0xf2] sm:$0xff]
          %v2765 = vld [vmem:[#allocation3 + $0xfa] sm:$0xff]
          %v2766 = vld [vmem:[#allocation3 + $0x10a] sm:$0xff]
          %v2767 = vld [vmem:[#allocation3 + $0x112] sm:$0xff]
          %v2768 = vld [vmem:[#allocation3 + $0x122] sm:$0xff]
          %v2769 = vld [vmem:[#allocation3 + $0x12a] sm:$0xff]
          %v2770 = vld [vmem:[#allocation3 + $0x13a] sm:$0xff]
          %v2771 = vld [vmem:[#allocation3 + $0x142] sm:$0xff]
          %v2772 = vld [vmem:[#allocation3 + $0x152] sm:$0xff]
          %v2773 = vld [vmem:[#allocation3 + $0x15a] sm:$0xff]
          %v2774 = vld [vmem:[#allocation3 + $0x16a] sm:$0xff]
          %v2775 = vld [vmem:[#allocation3 + $0x172] sm:$0xff]
          %v2776 = vadd.f32 %v2680, %v2744
          %v2777 = vadd.f32 %v2681, %v2745
          %v2778 = vadd.f32 %v2682, %v2746
          %v2779 = vadd.f32 %v2683, %v2747
          %v2780 = vadd.f32 %v2684, %v2748
          %v2781 = vadd.f32 %v2685, %v2749
          %v2782 = vadd.f32 %v2686, %v2750
          %v2783 = vadd.f32 %v2687, %v2751
          %v2784 = vadd.f32 %v2688, %v2752
          %v2785 = vadd.f32 %v2689, %v2753
          %v2786 = vadd.f32 %v2690, %v2754
          %v2787 = vadd.f32 %v2691, %v2755
          %v2788 = vadd.f32 %v2692, %v2756
          %v2789 = vadd.f32 %v2693, %v2757
          %v2790 = vadd.f32 %v2694, %v2758
          %v2791 = vadd.f32 %v2695, %v2759
          %v2792 = vadd.f32 %v2696, %v2760
          %v2793 = vadd.f32 %v2697, %v2761
          %v2794 = vadd.f32 %v2698, %v2762
          %v2795 = vadd.f32 %v2699, %v2763
          %v2796 = vadd.f32 %v2700, %v2764
          %v2797 = vadd.f32 %v2701, %v2765
          %v2798 = vadd.f32 %v2702, %v2766
          %v2799 = vadd.f32 %v2703, %v2767
          %v2800 = vadd.f32 %v2704, %v2768
          %v2801 = vadd.f32 %v2705, %v2769
          %v2802 = vadd.f32 %v2706, %v2770
          %v2803 = vadd.f32 %v2707, %v2771
          %v2804 = vadd.f32 %v2708, %v2772
          %v2805 = vadd.f32 %v2709, %v2773
          %v2806 = vadd.f32 %v2710, %v2774
          %v2807 = vadd.f32 %v2711, %v2775
          %v2808 = vmax.f32 %v2776, 0.0
          %v2809 = vmax.f32 %v2777, 0.0
          %v2810 = vmax.f32 %v2778, 0.0
          %v2811 = vmax.f32 %v2779, 0.0
          %v2812 = vmax.f32 %v2780, 0.0
          %v2813 = vmax.f32 %v2781, 0.0
          %v2814 = vmax.f32 %v2782, 0.0
          %v2815 = vmax.f32 %v2783, 0.0
          %v2816 = vmax.f32 %v2784, 0.0
          %v2817 = vmax.f32 %v2785, 0.0
          %v2818 = vmax.f32 %v2786, 0.0
          %v2819 = vmax.f32 %v2787, 0.0
          %v2820 = vmax.f32 %v2788, 0.0
          %v2821 = vmax.f32 %v2789, 0.0
          %v2822 = vmax.f32 %v2790, 0.0
          %v2823 = vmax.f32 %v2791, 0.0
          %v2824 = vmax.f32 %v2792, 0.0
          %v2825 = vmax.f32 %v2793, 0.0
          %v2826 = vmax.f32 %v2794, 0.0
          %v2827 = vmax.f32 %v2795, 0.0
          %v2828 = vmax.f32 %v2796, 0.0
          %v2829 = vmax.f32 %v2797, 0.0
          %v2830 = vmax.f32 %v2798, 0.0
          %v2831 = vmax.f32 %v2799, 0.0
          %v2832 = vmax.f32 %v2800, 0.0
          %v2833 = vmax.f32 %v2801, 0.0
          %v2834 = vmax.f32 %v2802, 0.0
          %v2835 = vmax.f32 %v2803, 0.0
          %v2836 = vmax.f32 %v2804, 0.0
          %v2837 = vmax.f32 %v2805, 0.0
          %v2838 = vmax.f32 %v2806, 0.0
          %v2839 = vmax.f32 %v2807, 0.0
          %v2840 = vpack.c.bf16 %v2809, %v2808
          %v2841 = vpack.c.bf16 %v2811, %v2810
          %v2842 = vpack.c.bf16 %v2813, %v2812
          %v2843 = vpack.c.bf16 %v2815, %v2814
          %v2844 = vpack.c.bf16 %v2817, %v2816
          %v2845 = vpack.c.bf16 %v2819, %v2818
          %v2846 = vpack.c.bf16 %v2821, %v2820
          %v2847 = vpack.c.bf16 %v2823, %v2822
          %v2848 = vpack.c.bf16 %v2825, %v2824
          %v2849 = vpack.c.bf16 %v2827, %v2826
          %v2850 = vpack.c.bf16 %v2829, %v2828
          %v2851 = vpack.c.bf16 %v2831, %v2830
          %v2852 = vpack.c.bf16 %v2833, %v2832
          %v2853 = vpack.c.bf16 %v2835, %v2834
          %v2854 = vpack.c.bf16 %v2837, %v2836
          %v2855 = vpack.c.bf16 %v2839, %v2838
          %v2872 = vunpack.c.l.b16 %v2840
          %v2873 = vunpack.c.h.b16 %v2840
          %v2874 = vunpack.c.l.b16 %v2841
          %v2875 = vunpack.c.h.b16 %v2841
          %v2876 = vunpack.c.l.b16 %v2842
          %v2877 = vunpack.c.h.b16 %v2842
          %v2878 = vunpack.c.l.b16 %v2843
          %v2879 = vunpack.c.h.b16 %v2843
          %v2880 = vunpack.c.l.b16 %v2844
          %v2881 = vunpack.c.h.b16 %v2844
          %v2882 = vunpack.c.l.b16 %v2845
          %v2883 = vunpack.c.h.b16 %v2845
          %v2884 = vunpack.c.l.b16 %v2846
          %v2885 = vunpack.c.h.b16 %v2846
          %v2886 = vunpack.c.l.b16 %v2847
          %v2887 = vunpack.c.h.b16 %v2847
          %v2888 = vunpack.c.l.b16 %v2848
          %v2889 = vunpack.c.h.b16 %v2848
          %v2890 = vunpack.c.l.b16 %v2849
          %v2891 = vunpack.c.h.b16 %v2849
          %v2892 = vunpack.c.l.b16 %v2850
          %v2893 = vunpack.c.h.b16 %v2850
          %v2894 = vunpack.c.l.b16 %v2851
          %v2895 = vunpack.c.h.b16 %v2851
          %v2896 = vunpack.c.l.b16 %v2852
          %v2897 = vunpack.c.h.b16 %v2852
          %v2898 = vunpack.c.l.b16 %v2853
          %v2899 = vunpack.c.h.b16 %v2853
          %v2900 = vunpack.c.l.b16 %v2854
          %v2901 = vunpack.c.h.b16 %v2854
          %v2902 = vunpack.c.l.b16 %v2855
          %v2903 = vunpack.c.h.b16 %v2855
          %v2904 = vpack.c.b16 %v2872, %v2872
          %v2905 = vpack.c.b16 %v2873, %v2873
          %v2906 = vpack.c.b16 %v2874, %v2874
          %v2907 = vpack.c.b16 %v2875, %v2875
          %v2908 = vpack.c.b16 %v2876, %v2876
          %v2909 = vpack.c.b16 %v2877, %v2877
          %v2910 = vpack.c.b16 %v2878, %v2878
          %v2911 = vpack.c.b16 %v2879, %v2879
          %v2912 = vpack.c.b16 %v2880, %v2880
          %v2913 = vpack.c.b16 %v2881, %v2881
          %v2914 = vpack.c.b16 %v2882, %v2882
          %v2915 = vpack.c.b16 %v2883, %v2883
          %v2916 = vpack.c.b16 %v2884, %v2884
          %v2917 = vpack.c.b16 %v2885, %v2885
          %v2918 = vpack.c.b16 %v2886, %v2886
          %v2919 = vpack.c.b16 %v2887, %v2887
          %v2920 = vpack.c.b16 %v2888, %v2888
          %v2921 = vpack.c.b16 %v2889, %v2889
          %v2922 = vpack.c.b16 %v2890, %v2890
          %v2923 = vpack.c.b16 %v2891, %v2891
          %v2924 = vpack.c.b16 %v2892, %v2892
          %v2925 = vpack.c.b16 %v2893, %v2893
          %v2926 = vpack.c.b16 %v2894, %v2894
          %v2927 = vpack.c.b16 %v2895, %v2895
          %v2928 = vpack.c.b16 %v2896, %v2896
          %v2929 = vpack.c.b16 %v2897, %v2897
          %v2930 = vpack.c.b16 %v2898, %v2898
          %v2931 = vpack.c.b16 %v2899, %v2899
          %v2932 = vpack.c.b16 %v2900, %v2900
          %v2933 = vpack.c.b16 %v2901, %v2901
          %v2934 = vpack.c.b16 %v2902, %v2902
          %v2935 = vpack.c.b16 %v2903, %v2903
          %2968 = vst [vmem:[%s1136] sm:$0xf] %v2904
          %2969 = vst [vmem:[%s1136 + $0x4] sm:$0xf] %v2905
          %2970 = vst [vmem:[%s1136 + $0x8] sm:$0xf] %v2906
          %2971 = vst [vmem:[%s1136 + $0xc] sm:$0xf] %v2907
          %2972 = vst [vmem:[%s1136 + $0x10] sm:$0xf] %v2908
          %2973 = vst [vmem:[%s1136 + $0x14] sm:$0xf] %v2909
          %2974 = vst [vmem:[%s1136 + $0x18] sm:$0xf] %v2910
          %2975 = vst [vmem:[%s1136 + $0x1c] sm:$0xf] %v2911
          %2976 = vst [vmem:[%s1136 + $0x20] sm:$0xf] %v2912
          %2977 = vst [vmem:[%s1136 + $0x24] sm:$0xf] %v2913
          %2978 = vst [vmem:[%s1136 + $0x28] sm:$0xf] %v2914
          %2979 = vst [vmem:[%s1136 + $0x2c] sm:$0xf] %v2915
          %2980 = vst [vmem:[%s1136 + $0x30] sm:$0xf] %v2916
          %2981 = vst [vmem:[%s1136 + $0x34] sm:$0xf] %v2917
          %2982 = vst [vmem:[%s1136 + $0x38] sm:$0xf] %v2918
          %2983 = vst [vmem:[%s1136 + $0x3c] sm:$0xf] %v2919
          %2984 = vst [vmem:[%s1136 + $0x40] sm:$0xf] %v2920
          %2985 = vst [vmem:[%s1136 + $0x44] sm:$0xf] %v2921
          %2986 = vst [vmem:[%s1136 + $0x48] sm:$0xf] %v2922
          %2987 = vst [vmem:[%s1136 + $0x4c] sm:$0xf] %v2923
          %2988 = vst [vmem:[%s1136 + $0x50] sm:$0xf] %v2924
          %2989 = vst [vmem:[%s1136 + $0x54] sm:$0xf] %v2925
          %2990 = vst [vmem:[%s1136 + $0x58] sm:$0xf] %v2926
          %2991 = vst [vmem:[%s1136 + $0x5c] sm:$0xf] %v2927
          %2992 = vst [vmem:[%s1136 + $0x60] sm:$0xf] %v2928
          %2993 = vst [vmem:[%s1136 + $0x64] sm:$0xf] %v2929
          %2994 = vst [vmem:[%s1136 + $0x68] sm:$0xf] %v2930
          %2995 = vst [vmem:[%s1136 + $0x6c] sm:$0xf] %v2931
          %2996 = vst [vmem:[%s1136 + $0x70] sm:$0xf] %v2932
          %2997 = vst [vmem:[%s1136 + $0x74] sm:$0xf] %v2933
          %2998 = vst [vmem:[%s1136 + $0x78] sm:$0xf] %v2934
          %2999 = vst [vmem:[%s1136 + $0x7c] sm:$0xf] %v2935
          %3000 = vst [vmem:[%s203] sm:$0xff] %v2808
          %3001 = vst [vmem:[%s203 + $0x8] sm:$0xff] %v2809
          %3002 = vst [vmem:[%s203 + $0x10] sm:$0xff] %v2810
          %3003 = vst [vmem:[%s203 + $0x18] sm:$0xff] %v2811
          %3004 = vst [vmem:[%s203 + $0x20] sm:$0xff] %v2812
          %3005 = vst [vmem:[%s203 + $0x28] sm:$0xff] %v2813
          %3006 = vst [vmem:[%s203 + $0x30] sm:$0xff] %v2814
          %3007 = vst [vmem:[%s203 + $0x38] sm:$0xff] %v2815
          %3008 = vst [vmem:[%s203 + $0x40] sm:$0xff] %v2816
          %3009 = vst [vmem:[%s203 + $0x48] sm:$0xff] %v2817
          %3010 = vst [vmem:[%s203 + $0x50] sm:$0xff] %v2818
          %3011 = vst [vmem:[%s203 + $0x58] sm:$0xff] %v2819
          %3012 = vst [vmem:[%s203 + $0x60] sm:$0xff] %v2820
          %3013 = vst [vmem:[%s203 + $0x68] sm:$0xff] %v2821
          %3014 = vst [vmem:[%s203 + $0x70] sm:$0xff] %v2822
          %3015 = vst [vmem:[%s203 + $0x78] sm:$0xff] %v2823
          %3016 = vst [vmem:[%s203 + $0x80] sm:$0xff] %v2824
          %3017 = vst [vmem:[%s203 + $0x88] sm:$0xff] %v2825
          %3018 = vst [vmem:[%s203 + $0x90] sm:$0xff] %v2826
          %3019 = vst [vmem:[%s203 + $0x98] sm:$0xff] %v2827
          %3020 = vst [vmem:[%s203 + $0xa0] sm:$0xff] %v2828
          %3021 = vst [vmem:[%s203 + $0xa8] sm:$0xff] %v2829
          %3022 = vst [vmem:[%s203 + $0xb0] sm:$0xff] %v2830
          %3023 = vst [vmem:[%s203 + $0xb8] sm:$0xff] %v2831
          %3024 = vst [vmem:[%s203 + $0xc0] sm:$0xff] %v2832
          %3025 = vst [vmem:[%s203 + $0xc8] sm:$0xff] %v2833
          %3026 = vst [vmem:[%s203 + $0xd0] sm:$0xff] %v2834
          %3027 = vst [vmem:[%s203 + $0xd8] sm:$0xff] %v2835
          %3028 = vst [vmem:[%s203 + $0xe0] sm:$0xff] %v2836
          %3029 = vst [vmem:[%s203 + $0xe8] sm:$0xff] %v2837
          %3030 = vst [vmem:[%s203 + $0xf0] sm:$0xff] %v2838
          %3031 = vst [vmem:[%s203 + $0xf8] sm:$0xff] %v2839
        $region45: #{tpu_custom_call.1} parent=31 // loop_footer
          %s397 = sadd.s32 1, %s393
        $region46: #{tpu_custom_call.1} parent=31 // loop_footer_branch
          %392 = sbr.rel target = $region42
        $region47: #{tpu_custom_call.1} parent=31 // loop_exit
          _
        %s3032 = sand.u32 %s97, 1
        %s3033 = scalar_lea.sflag [#allocation6], %s3032
        %s3034 = sand.u32 %s97, 1
        %s3035 = smul.addr %s3034, 256
        %s3036 = scalar_lea.vmem [#allocation9], %s3035
        // Predicated region
        $region48: #{tpu_custom_call.1} parent=31 // pred_check
          %p3037 = pneg %p107
        $region49: #{tpu_custom_call.1} parent=31 // pred_check_branch
          %3039 = sbr.rel (%p3037) target = $region51
        $region50: #{tpu_custom_call.1} parent=31 // pred_region
          %s3041 = ssub.s32 4096, 4096
          %3042 = vsyncadd %s3033, %s3041
          %s3043 = smul.addr %s21, 32
          %s3044 = smul.addr %s3043, 128
          %s3045 = scalar_lea.hbm %s3, %s3044
          %s3046 = sshll.u32 %s3036, 4
          %s3047 = int_to_ptr.vmem [resolvable:$true] %s3046
          %3052 = dma.vmem_to_hbm [thread:$0]  %s3047, 4096, %s3045, %s3033, 128, 128, 8
        $region51: #{tpu_custom_call.1} parent=31 // pred_fallthru
          _
      $region32: #{tpu_custom_call.1} parent=5 // pred_fallthru
        _
      %p3053 = scmp.le.s32.totalorder 2, %s16
      // Predicated region
      $region52: #{tpu_custom_call.1} parent=5 // pred_check
        %p3054 = pneg %p3053
      $region53: #{tpu_custom_call.1} parent=5 // pred_check_branch
        %3056 = sbr.rel (%p3054) target = $region55
      $region54: #{tpu_custom_call.1} parent=5 // pred_region
        %s3057 = ssub.s32 %s16, 2
        // Predicated region
        $region56: #{tpu_custom_call.1} parent=54 // pred_check
          %p3058 = pneg %p113
        $region57: #{tpu_custom_call.1} parent=54 // pred_check_branch
          %3060 = sbr.rel (%p3058) target = $region59
        $region58: #{tpu_custom_call.1} parent=54 // pred_region
          %s3061 = sand.u32 %s98, 1
          %s3062 = scalar_lea.sflag [#allocation6], %s3061
          %s3063 = sand.u32 %s98, 1
          %s3064 = smul.addr %s3063, 256
          %s3065 = scalar_lea.vmem [#allocation9], %s3064
          %3066 = dma.done %s3062, 4096
        $region59: #{tpu_custom_call.1} parent=54 // pred_fallthru
          _
      $region55: #{tpu_custom_call.1} parent=5 // pred_fallthru
        _
    $region6: #{tpu_custom_call.1} parent=1 // loop_footer
      %s20 = sadd.s32 1, %s16
    $region7: #{tpu_custom_call.1} parent=1 // loop_footer_branch
      %15 = sbr.rel target = $region3
    $region8: #{tpu_custom_call.1} parent=1 // loop_exit
      _
    %3067 = vsyncpa [#allocation5], 1
    %s3068 = scalar_lea.sflag [#allocation5], 1
    %3069 = vsyncpa %s3068, 1
    %3070 = vsyncpa [#allocation8], 1
    %3071 = vsyncpa [#allocation6], 1
    %s3072 = scalar_lea.sflag [#allocation6], 1
    %3073 = vsyncpa %s3072, 1

</llo_original>
